<compile_context>
chip_gen: v5e
topology: v5e:2x2
jax: 0.10.0
libtpu: 0.0.40
codegen_flags: <defaults>
</compile_context>

<pallas_src>
import functools

import jax
import jax.numpy as jnp
from jax.experimental import pallas as pl
from jax.experimental.pallas import tpu as pltpu


def _make_kernel(K, W_pad, P):
    """Kernel: stride-1 'valid' conv over the flattened padded image.

    x_ref: (1, Cin, X_len)      bf16  flat padded image (+1 clamped halo row)
    w_ref: (K*K, Cout, Cin)     bf16  weights grouped per tap
    b_ref: (Cout, 1)            f32   bias
    o_ref: (1, Cout, P)         f32   flat output, P = H_c1 * W_pad (lane-dense;
                                      the K-1 wrap columns per row are garbage
                                      and are sliced off on the host)
    """

    def kernel(x_ref, w_ref, b_ref, o_ref):
        cout = o_ref.shape[1]
        acc = jnp.zeros((cout, P), jnp.float32)
        for kh in range(K):
            for kw in range(K):
                shift = kh * W_pad + kw                       # static
                x_tap = x_ref[0, :, pl.ds(shift, P)]          # (Cin, P)  bf16
                w_tap = w_ref[kh * K + kw]                    # (Cout, Cin) bf16
                acc = acc + jnp.dot(w_tap, x_tap,
                                    preferred_element_type=jnp.float32)
        # f32 epilogue (bias add), single cast at the final store.
        o_ref[0] = (acc + b_ref[...]).astype(o_ref.dtype)

    return kernel


def _reflect_upsample_index(p, pad, size_up, up):
    """Map padded (and upsampled) coordinate p -> source coordinate in the
    original (pre-upsample) axis.  ReflectionPad2d semantics (edge not
    repeated); nearest-neighbour upsample is floor division by the scale.
    Note: assumes pad <= size_up - 1 (single-fold reflection, odd K usage)."""
    q = p - pad
    q = jnp.where(q < 0, -q, q)                          # reflect low edge
    q = jnp.where(q >= size_up, 2 * size_up - 2 - q, q)  # reflect high edge
    return q // up


@functools.partial(jax.jit, static_argnames=("kernel_size", "stride", "upsample"))
def upconv2d(x_nchw, weight_oihw, bias, *, kernel_size, stride, upsample=None):
    """Forward pass of UpConv2d.  x_nchw: (N, Cin, H, W) float32, NCHW in/out."""
    N, Cin, H, W = x_nchw.shape
    Cout = weight_oihw.shape[0]
    K = kernel_size
    up = 1 if upsample is None else int(upsample)
    pad = K // 2  # matches nn.ReflectionPad2d(kernel_size // 2); odd K intended

    H_up, W_up = H * up, W * up
    H_pad, W_pad = H_up + 2 * pad, W_up + 2 * pad
    # stride-1 "valid" conv extent; final stride applied by host subsampling.
    H_c1 = H_pad - K + 1
    W_c1 = W_pad - K + 1
    H_out = (H_pad - K) // stride + 1
    W_out = (W_pad - K) // stride + 1

    # --- fused nearest-upsample + reflection-pad: two tiny per-axis gathers ---
    # One extra clamped halo row keeps every in-kernel tap shift in-bounds
    # (only garbage output positions ever read it).
    H_ext = H_pad + 1
    row_src = _reflect_upsample_index(
        jnp.minimum(jnp.arange(H_ext), H_pad - 1), pad, H_up, up)     # (H_ext,)
    col_src = _reflect_upsample_index(jnp.arange(W_pad), pad, W_up, up)  # (W_pad,)

    x_b = x_nchw.astype(jnp.bfloat16)                      # halve the HBM stream
    x_g = x_b[:, :, row_src, :][:, :, :, col_src]          # (N, Cin, H_ext, W_pad)
    X_len = H_ext * W_pad
    x_flat = x_g.reshape(N, Cin, X_len)                    # row-major flatten

    # Weights grouped per tap (tap-major) for the per-tap accumulation; bf16.
    w_taps = jnp.transpose(weight_oihw, (2, 3, 0, 1)).reshape(K * K, Cout, Cin)
    w_taps = w_taps.astype(jnp.bfloat16)
    b2 = bias.reshape(Cout, 1).astype(jnp.float32)

    # Flat output length per image: H_c1 full-W_pad rows (lane-dense stores);
    # the last K-1 columns of each row are wrap garbage, sliced off below.
    P = H_c1 * W_pad

    out_flat = pl.pallas_call(
        _make_kernel(K, W_pad, P),
        out_shape=jax.ShapeDtypeStruct((N, Cout, P), jnp.float32),
        grid=(N,),
        in_specs=[
            pl.BlockSpec((1, Cin, X_len), lambda n: (n, 0, 0)),
            pl.BlockSpec((K * K, Cout, Cin), lambda n: (0, 0, 0)),
            pl.BlockSpec((Cout, 1), lambda n: (0, 0)),
        ],
        out_specs=pl.BlockSpec((1, Cout, P), lambda n: (n, 0, 0)),
        compiler_params=pltpu.CompilerParams(
            dimension_semantics=("parallel",)),
    )(x_flat, w_taps, b2)

    out = out_flat.reshape(N, Cout, H_c1, W_pad)
    # Drop wrap columns and apply the conv stride by subsampling.
    out = out[:, :, ::stride, ::stride][:, :, :H_out, :W_out]
    return out


def _reference(x_nchw, weight_oihw, bias, *, kernel_size, stride, upsample=None):
    """Pure-JAX f32 reference (XLA conv) for correctness check."""
    if upsample is not None:
        x_nchw = jnp.repeat(x_nchw, upsample, axis=2)
        x_nchw = jnp.repeat(x_nchw, upsample, axis=3)
    pad = kernel_size // 2
    x_nchw = jnp.pad(x_nchw, ((0, 0), (0, 0), (pad, pad), (pad, pad)), mode="reflect")
    out = jax.lax.conv_general_dilated(
        x_nchw, weight_oihw, window_strides=(stride, stride), padding="VALID",
        dimension_numbers=("NCHW", "OIHW", "NCHW"))
    return out + bias[None, :, None, None]


if __name__ == "__main__":
    # Module config: UpConv2d(in_channels=4, out_channels=8, kernel_size=3,
    #                         stride=1, upsample=2)
    N, Cin, H, W = 2, 4, 16, 16
    Cout, K = 8, 3

    key = jax.random.PRNGKey(0)
    kx, kw_, kb = jax.random.split(key, 3)
    x = jax.random.normal(kx, (N, Cin, H, W), dtype=jnp.float32)
    weight = jax.random.normal(kw_, (Cout, Cin, K, K), dtype=jnp.float32) * 0.1
    bias = jax.random.normal(kb, (Cout,), dtype=jnp.float32) * 0.1

    # Tolerance reflects bf16 operand rounding (f32 accumulate) vs f32 reference.
    TOL = 2e-2

    # Primary config (the one the module is instantiated with).
    out = jax.block_until_ready(
        upconv2d(x, weight, bias, kernel_size=K, stride=1, upsample=2))
    ref = _reference(x, weight, bias, kernel_size=K, stride=1, upsample=2)
    assert out.shape == ref.shape, (out.shape, ref.shape)
    assert jnp.allclose(out, ref, rtol=TOL, atol=TOL), float(
        jnp.max(jnp.abs(out - ref)))

    # Secondary check: stride=2, no upsample (validates the strided path).
    out2 = jax.block_until_ready(
        upconv2d(x, weight, bias, kernel_size=K, stride=2, upsample=None))
    ref2 = _reference(x, weight, bias, kernel_size=K, stride=2, upsample=None)
    assert out2.shape == ref2.shape, (out2.shape, ref2.shape)
    assert jnp.allclose(out2, ref2, rtol=TOL, atol=TOL), float(
        jnp.max(jnp.abs(out2 - ref2)))

    print("KERNEL_OK")
</pallas_src>

<mosaic_0001>
module attributes {stable_mosaic.version = 11 : i64} {
  func.func @kernel(%arg0: i32, %arg1: memref<1x4x1190xbf16, #tpu.memory_space<vmem>>, %arg2: memref<9x8x4xbf16, #tpu.memory_space<vmem>>, %arg3: memref<8x1xf32, #tpu.memory_space<vmem>>, %arg4: memref<1x8x1088xf32, #tpu.memory_space<vmem>>) attributes {dimension_semantics = [#tpu.dimension_semantics<parallel>], iteration_bounds = array<i64: 2>, scalar_prefetch = 0 : i64, scratch_operands = 0 : i64, tpu.core_type = #tpu.core_type<tc>, window_params = [{transform_indices = @transform_0, window_bounds = array<i64: 1, 4, 1190>}, {pipeline_mode = #tpu.pipeline_mode<synchronous>, transform_indices = @transform_1, window_bounds = array<i64: 9, 8, 4>}, {pipeline_mode = #tpu.pipeline_mode<synchronous>, transform_indices = @transform_2, window_bounds = array<i64: 8, 1>}, {transform_indices = @transform_3, window_bounds = array<i64: 1, 8, 1088>}]} {
    %cst = arith.constant 0.000000e+00 : f32
    %0 = vector.broadcast %cst : f32 to vector<8x1088xf32>
    %c0 = arith.constant 0 : index
    %c0_0 = arith.constant 0 : index
    %c0_1 = arith.constant 0 : index
    %1 = vector.load %arg1[%c0, %c0_0, %c0_1] : memref<1x4x1190xbf16, #tpu.memory_space<vmem>>, vector<1x4x1088xbf16>
    %2 = vector.shape_cast %1 : vector<1x4x1088xbf16> to vector<4x1088xbf16>
    %c0_2 = arith.constant 0 : index
    %c0_3 = arith.constant 0 : index
    %c0_4 = arith.constant 0 : index
    %3 = vector.load %arg2[%c0_2, %c0_3, %c0_4] : memref<9x8x4xbf16, #tpu.memory_space<vmem>>, vector<1x8x4xbf16>
    %4 = vector.shape_cast %3 : vector<1x8x4xbf16> to vector<8x4xbf16>
    %cst_5 = arith.constant dense<0.000000e+00> : vector<8x1088xf32>
    %5 = tpu.matmul %4, %2, %cst_5 {dimension_numbers = #tpu.dot_dimension_numbers<[1], [0], [0], [1], [0, 0, 1, 1], [], []>} : vector<8x4xbf16>, vector<4x1088xbf16>, vector<8x1088xf32> -> vector<8x1088xf32>
    %6 = arith.addf %0, %5 : vector<8x1088xf32>
    %c0_6 = arith.constant 0 : index
    %c0_7 = arith.constant 0 : index
    %c1 = arith.constant 1 : index
    %7 = vector.load %arg1[%c0_6, %c0_7, %c1] : memref<1x4x1190xbf16, #tpu.memory_space<vmem>>, vector<1x4x1088xbf16>
    %8 = vector.shape_cast %7 : vector<1x4x1088xbf16> to vector<4x1088xbf16>
    %c1_8 = arith.constant 1 : index
    %c0_9 = arith.constant 0 : index
    %c0_10 = arith.constant 0 : index
    %9 = vector.load %arg2[%c1_8, %c0_9, %c0_10] : memref<9x8x4xbf16, #tpu.memory_space<vmem>>, vector<1x8x4xbf16>
    %10 = vector.shape_cast %9 : vector<1x8x4xbf16> to vector<8x4xbf16>
    %cst_11 = arith.constant dense<0.000000e+00> : vector<8x1088xf32>
    %11 = tpu.matmul %10, %8, %cst_11 {dimension_numbers = #tpu.dot_dimension_numbers<[1], [0], [0], [1], [0, 0, 1, 1], [], []>} : vector<8x4xbf16>, vector<4x1088xbf16>, vector<8x1088xf32> -> vector<8x1088xf32>
    %12 = arith.addf %6, %11 : vector<8x1088xf32>
    %c0_12 = arith.constant 0 : index
    %c0_13 = arith.constant 0 : index
    %c2 = arith.constant 2 : index
    %13 = vector.load %arg1[%c0_12, %c0_13, %c2] : memref<1x4x1190xbf16, #tpu.memory_space<vmem>>, vector<1x4x1088xbf16>
    %14 = vector.shape_cast %13 : vector<1x4x1088xbf16> to vector<4x1088xbf16>
    %c2_14 = arith.constant 2 : index
    %c0_15 = arith.constant 0 : index
    %c0_16 = arith.constant 0 : index
    %15 = vector.load %arg2[%c2_14, %c0_15, %c0_16] : memref<9x8x4xbf16, #tpu.memory_space<vmem>>, vector<1x8x4xbf16>
    %16 = vector.shape_cast %15 : vector<1x8x4xbf16> to vector<8x4xbf16>
    %cst_17 = arith.constant dense<0.000000e+00> : vector<8x1088xf32>
    %17 = tpu.matmul %16, %14, %cst_17 {dimension_numbers = #tpu.dot_dimension_numbers<[1], [0], [0], [1], [0, 0, 1, 1], [], []>} : vector<8x4xbf16>, vector<4x1088xbf16>, vector<8x1088xf32> -> vector<8x1088xf32>
    %18 = arith.addf %12, %17 : vector<8x1088xf32>
    %c0_18 = arith.constant 0 : index
    %c0_19 = arith.constant 0 : index
    %c34 = arith.constant 34 : index
    %19 = vector.load %arg1[%c0_18, %c0_19, %c34] : memref<1x4x1190xbf16, #tpu.memory_space<vmem>>, vector<1x4x1088xbf16>
    %20 = vector.shape_cast %19 : vector<1x4x1088xbf16> to vector<4x1088xbf16>
    %c3 = arith.constant 3 : index
    %c0_20 = arith.constant 0 : index
    %c0_21 = arith.constant 0 : index
    %21 = vector.load %arg2[%c3, %c0_20, %c0_21] : memref<9x8x4xbf16, #tpu.memory_space<vmem>>, vector<1x8x4xbf16>
    %22 = vector.shape_cast %21 : vector<1x8x4xbf16> to vector<8x4xbf16>
    %cst_22 = arith.constant dense<0.000000e+00> : vector<8x1088xf32>
    %23 = tpu.matmul %22, %20, %cst_22 {dimension_numbers = #tpu.dot_dimension_numbers<[1], [0], [0], [1], [0, 0, 1, 1], [], []>} : vector<8x4xbf16>, vector<4x1088xbf16>, vector<8x1088xf32> -> vector<8x1088xf32>
    %24 = arith.addf %18, %23 : vector<8x1088xf32>
    %c0_23 = arith.constant 0 : index
    %c0_24 = arith.constant 0 : index
    %c35 = arith.constant 35 : index
    %25 = vector.load %arg1[%c0_23, %c0_24, %c35] : memref<1x4x1190xbf16, #tpu.memory_space<vmem>>, vector<1x4x1088xbf16>
    %26 = vector.shape_cast %25 : vector<1x4x1088xbf16> to vector<4x1088xbf16>
    %c4 = arith.constant 4 : index
    %c0_25 = arith.constant 0 : index
    %c0_26 = arith.constant 0 : index
    %27 = vector.load %arg2[%c4, %c0_25, %c0_26] : memref<9x8x4xbf16, #tpu.memory_space<vmem>>, vector<1x8x4xbf16>
    %28 = vector.shape_cast %27 : vector<1x8x4xbf16> to vector<8x4xbf16>
    %cst_27 = arith.constant dense<0.000000e+00> : vector<8x1088xf32>
    %29 = tpu.matmul %28, %26, %cst_27 {dimension_numbers = #tpu.dot_dimension_numbers<[1], [0], [0], [1], [0, 0, 1, 1], [], []>} : vector<8x4xbf16>, vector<4x1088xbf16>, vector<8x1088xf32> -> vector<8x1088xf32>
    %30 = arith.addf %24, %29 : vector<8x1088xf32>
    %c0_28 = arith.constant 0 : index
    %c0_29 = arith.constant 0 : index
    %c36 = arith.constant 36 : index
    %31 = vector.load %arg1[%c0_28, %c0_29, %c36] : memref<1x4x1190xbf16, #tpu.memory_space<vmem>>, vector<1x4x1088xbf16>
    %32 = vector.shape_cast %31 : vector<1x4x1088xbf16> to vector<4x1088xbf16>
    %c5 = arith.constant 5 : index
    %c0_30 = arith.constant 0 : index
    %c0_31 = arith.constant 0 : index
    %33 = vector.load %arg2[%c5, %c0_30, %c0_31] : memref<9x8x4xbf16, #tpu.memory_space<vmem>>, vector<1x8x4xbf16>
    %34 = vector.shape_cast %33 : vector<1x8x4xbf16> to vector<8x4xbf16>
    %cst_32 = arith.constant dense<0.000000e+00> : vector<8x1088xf32>
    %35 = tpu.matmul %34, %32, %cst_32 {dimension_numbers = #tpu.dot_dimension_numbers<[1], [0], [0], [1], [0, 0, 1, 1], [], []>} : vector<8x4xbf16>, vector<4x1088xbf16>, vector<8x1088xf32> -> vector<8x1088xf32>
    %36 = arith.addf %30, %35 : vector<8x1088xf32>
    %c0_33 = arith.constant 0 : index
    %c0_34 = arith.constant 0 : index
    %c68 = arith.constant 68 : index
    %37 = vector.load %arg1[%c0_33, %c0_34, %c68] : memref<1x4x1190xbf16, #tpu.memory_space<vmem>>, vector<1x4x1088xbf16>
    %38 = vector.shape_cast %37 : vector<1x4x1088xbf16> to vector<4x1088xbf16>
    %c6 = arith.constant 6 : index
    %c0_35 = arith.constant 0 : index
    %c0_36 = arith.constant 0 : index
    %39 = vector.load %arg2[%c6, %c0_35, %c0_36] : memref<9x8x4xbf16, #tpu.memory_space<vmem>>, vector<1x8x4xbf16>
    %40 = vector.shape_cast %39 : vector<1x8x4xbf16> to vector<8x4xbf16>
    %cst_37 = arith.constant dense<0.000000e+00> : vector<8x1088xf32>
    %41 = tpu.matmul %40, %38, %cst_37 {dimension_numbers = #tpu.dot_dimension_numbers<[1], [0], [0], [1], [0, 0, 1, 1], [], []>} : vector<8x4xbf16>, vector<4x1088xbf16>, vector<8x1088xf32> -> vector<8x1088xf32>
    %42 = arith.addf %36, %41 : vector<8x1088xf32>
    %c0_38 = arith.constant 0 : index
    %c0_39 = arith.constant 0 : index
    %c69 = arith.constant 69 : index
    %43 = vector.load %arg1[%c0_38, %c0_39, %c69] : memref<1x4x1190xbf16, #tpu.memory_space<vmem>>, vector<1x4x1088xbf16>
    %44 = vector.shape_cast %43 : vector<1x4x1088xbf16> to vector<4x1088xbf16>
    %c7 = arith.constant 7 : index
    %c0_40 = arith.constant 0 : index
    %c0_41 = arith.constant 0 : index
    %45 = vector.load %arg2[%c7, %c0_40, %c0_41] : memref<9x8x4xbf16, #tpu.memory_space<vmem>>, vector<1x8x4xbf16>
    %46 = vector.shape_cast %45 : vector<1x8x4xbf16> to vector<8x4xbf16>
    %cst_42 = arith.constant dense<0.000000e+00> : vector<8x1088xf32>
    %47 = tpu.matmul %46, %44, %cst_42 {dimension_numbers = #tpu.dot_dimension_numbers<[1], [0], [0], [1], [0, 0, 1, 1], [], []>} : vector<8x4xbf16>, vector<4x1088xbf16>, vector<8x1088xf32> -> vector<8x1088xf32>
    %48 = arith.addf %42, %47 : vector<8x1088xf32>
    %c0_43 = arith.constant 0 : index
    %c0_44 = arith.constant 0 : index
    %c70 = arith.constant 70 : index
    %49 = vector.load %arg1[%c0_43, %c0_44, %c70] : memref<1x4x1190xbf16, #tpu.memory_space<vmem>>, vector<1x4x1088xbf16>
    %50 = vector.shape_cast %49 : vector<1x4x1088xbf16> to vector<4x1088xbf16>
    %c8 = arith.constant 8 : index
    %c0_45 = arith.constant 0 : index
    %c0_46 = arith.constant 0 : index
    %51 = vector.load %arg2[%c8, %c0_45, %c0_46] : memref<9x8x4xbf16, #tpu.memory_space<vmem>>, vector<1x8x4xbf16>
    %52 = vector.shape_cast %51 : vector<1x8x4xbf16> to vector<8x4xbf16>
    %cst_47 = arith.constant dense<0.000000e+00> : vector<8x1088xf32>
    %53 = tpu.matmul %52, %50, %cst_47 {dimension_numbers = #tpu.dot_dimension_numbers<[1], [0], [0], [1], [0, 0, 1, 1], [], []>} : vector<8x4xbf16>, vector<4x1088xbf16>, vector<8x1088xf32> -> vector<8x1088xf32>
    %54 = arith.addf %48, %53 : vector<8x1088xf32>
    %c0_48 = arith.constant 0 : index
    %c0_49 = arith.constant 0 : index
    %55 = vector.load %arg3[%c0_48, %c0_49] : memref<8x1xf32, #tpu.memory_space<vmem>>, vector<8x1xf32>
    %56 = vector.broadcast %55 : vector<8x1xf32> to vector<8x1088xf32>
    %57 = arith.addf %54, %56 : vector<8x1088xf32>
    %c0_50 = arith.constant 0 : index
    %c0_51 = arith.constant 0 : index
    %c0_52 = arith.constant 0 : index
    %58 = vector.load %arg4[%c0_50, %c0_51, %c0_52] : memref<1x8x1088xf32, #tpu.memory_space<vmem>>, vector<1x8x1088xf32>
    %59 = vector.shape_cast %58 : vector<1x8x1088xf32> to vector<8x1088xf32>
    %60 = vector.shape_cast %57 : vector<8x1088xf32> to vector<1x8x1088xf32>
    tpu.vector_store %arg4[%c0_50, %c0_51, %c0_52], %60 {strides = array<i32>} : memref<1x8x1088xf32, #tpu.memory_space<vmem>>, vector<1x8x1088xf32>,
    return
  }
  func.func @transform_0(%arg0: i32) -> (i32, i32, i32) {
    %c0_i32 = arith.constant 0 : i32
    %c0_i32_0 = arith.constant 0 : i32
    %c0_i32_1 = arith.constant 0 : i32
    return %arg0, %c0_i32, %c0_i32_0 : i32, i32, i32
  }
  func.func @transform_1(%arg0: i32) -> (i32, i32, i32) {
    %c0_i32 = arith.constant 0 : i32
    %c0_i32_0 = arith.constant 0 : i32
    %c0_i32_1 = arith.constant 0 : i32
    %c0_i32_2 = arith.constant 0 : i32
    return %c0_i32, %c0_i32_0, %c0_i32_1 : i32, i32, i32
  }
  func.func @transform_2(%arg0: i32) -> (i32, i32) {
    %c0_i32 = arith.constant 0 : i32
    %c0_i32_0 = arith.constant 0 : i32
    %c0_i32_1 = arith.constant 0 : i32
    return %c0_i32, %c0_i32_0 : i32, i32
  }
  func.func @transform_3(%arg0: i32) -> (i32, i32, i32) {
    %c0_i32 = arith.constant 0 : i32
    %c0_i32_0 = arith.constant 0 : i32
    %c0_i32_1 = arith.constant 0 : i32
    return %arg0, %c0_i32, %c0_i32_0 : i32, i32, i32
  }
}

</mosaic_0001>

<llo_original>
// kernel: upconv2d.1
$region0: #{upconv2d.1}
  #allocation0 [shape = 'u32[]', space=smem, size = 0x4, offset = 0x4, fixed_abs, tag = 'smem constant byte address 0x4 - core index']
  #allocation1 [shape = 'u32[72,128]{1,0:T(1,128)}', space=vmem, size = 0x9000, scoped, tag = 'internal scratch']
  %s0 = inlined_call_operand.vmem [shape: bf16[2,4,1190], index: 0, kind: input, shape index: {}]
  %s1 = inlined_call_operand.vmem [shape: bf16[9,8,4], index: 1, kind: input, shape index: {}]
  %s2 = inlined_call_operand.vmem [shape: f32[8,1], index: 2, kind: input, shape index: {}]
  %s3 = inlined_call_operand.vmem [shape: f32[2,8,1088], index: 3, kind: output, shape index: {}]
  %s4 = sld [smem:[#allocation0]]
  $region45: #{upconv2d.1} parent=0
    _
  %s6 = ssub.s32 1, %s4
  %s7 = scalar_select 0, %s6, %s4
  loop: start=0, step=1, limit=4
  $region2: #{upconv2d.1} parent=0 // loop_pre_header
    _
  $region3: #{upconv2d.1} parent=0 // loop_header
    %s9 = sphi 0, %s13
    %p10 = scmp.ge.s32.totalorder %s9, 4
    %s19 = sphi 0, %s21
    %s22 = sphi 0, %s19
    %s23 = sphi 0, %s22
    %s39 = sphi 0, %s23
    %s43 = sphi 0, %s43
    %s45 = sphi 0, %s43
    %s46 = sphi 0, %s45
    %s60 = sphi 0, %s46
    %s64 = sphi 0, %s64
    %s66 = sphi 0, %s64
    %s67 = sphi 0, %s66
    %s81 = sphi 0, %s67
    %s87 = sphi 0, %s89
    %s90 = sphi 0, %s87
    %s91 = sphi 0, %s90
    %s107 = sphi 0, %s91
  $region4: #{upconv2d.1} parent=0 // loop_header_branch
    %12 = sbr.rel (%p10) target = $region8
  $region5: #{upconv2d.1} parent=0 // loop_body
    %s14 = ssub.s32 %s9, 1
    %s15 = ssub.s32 %s9, 2
    %s16 = sadd.s32 %s9, 1
    %s17 = ssub.s32 %s9, %s16
    %p18 = scmp.eq.s32.totalorder %s17, 0
    %s20 = sadd.s32 %s19, 1
    %s21 = scalar_select %p18, %s19, %s20
    %p24 = pneg %p18
    %p25 = scmp.eq.s32.totalorder %s9, 1
    %p26 = por %p24, %p25
    %p27 = scmp.ne.s32.totalorder %s19, %s22
    %p28 = scmp.eq.s32.totalorder %s9, 0
    %p29 = por %p27, %p28
    %p30 = scmp.ne.s32.totalorder %s19, %s22
    %p31 = scmp.eq.s32.totalorder %s14, 1
    %p32 = por %p30, %p31
    %p33 = scmp.ne.s32.totalorder %s22, %s23
    %p34 = scmp.eq.s32.totalorder %s14, 0
    %p35 = por %p33, %p34
    %p36 = scmp.ne.s32.totalorder %s22, %s23
    %p37 = scmp.eq.s32.totalorder %s15, 1
    %p38 = por %p36, %p37
    %p40 = scmp.ne.s32.totalorder %s23, %s39
    %p41 = scmp.eq.s32.totalorder %s15, 0
    %p42 = por %p40, %p41
    %s44 = sadd.s32 %s43, 1
    %p47 = scmp.eq.s32.totalorder %s9, 1
    %p48 = scmp.ne.s32.totalorder %s43, %s45
    %p49 = scmp.eq.s32.totalorder %s9, 0
    %p50 = por %p48, %p49
    %p51 = scmp.ne.s32.totalorder %s43, %s45
    %p52 = scmp.eq.s32.totalorder %s14, 1
    %p53 = por %p51, %p52
    %p54 = scmp.ne.s32.totalorder %s45, %s46
    %p55 = scmp.eq.s32.totalorder %s14, 0
    %p56 = por %p54, %p55
    %p57 = scmp.ne.s32.totalorder %s45, %s46
    %p58 = scmp.eq.s32.totalorder %s15, 1
    %p59 = por %p57, %p58
    %p61 = scmp.ne.s32.totalorder %s46, %s60
    %p62 = scmp.eq.s32.totalorder %s15, 0
    %p63 = por %p61, %p62
    %s65 = sadd.s32 %s64, 1
    %p68 = scmp.eq.s32.totalorder %s9, 1
    %p69 = scmp.ne.s32.totalorder %s64, %s66
    %p70 = scmp.eq.s32.totalorder %s9, 0
    %p71 = por %p69, %p70
    %p72 = scmp.ne.s32.totalorder %s64, %s66
    %p73 = scmp.eq.s32.totalorder %s14, 1
    %p74 = por %p72, %p73
    %p75 = scmp.ne.s32.totalorder %s66, %s67
    %p76 = scmp.eq.s32.totalorder %s14, 0
    %p77 = por %p75, %p76
    %p78 = scmp.ne.s32.totalorder %s66, %s67
    %p79 = scmp.eq.s32.totalorder %s15, 1
    %p80 = por %p78, %p79
    %p82 = scmp.ne.s32.totalorder %s67, %s81
    %p83 = scmp.eq.s32.totalorder %s15, 0
    %p84 = por %p82, %p83
    %s85 = ssub.s32 %s9, %s16
    %p86 = scmp.eq.s32.totalorder %s85, 0
    %s88 = sadd.s32 %s87, 1
    %s89 = scalar_select %p86, %s87, %s88
    %p92 = pneg %p86
    %p93 = scmp.eq.s32.totalorder %s9, 1
    %p94 = por %p92, %p93
    %p95 = scmp.ne.s32.totalorder %s87, %s90
    %p96 = scmp.eq.s32.totalorder %s9, 0
    %p97 = por %p95, %p96
    %p98 = scmp.ne.s32.totalorder %s87, %s90
    %p99 = scmp.eq.s32.totalorder %s14, 1
    %p100 = por %p98, %p99
    %p101 = scmp.ne.s32.totalorder %s90, %s91
    %p102 = scmp.eq.s32.totalorder %s14, 0
    %p103 = por %p101, %p102
    %p104 = scmp.ne.s32.totalorder %s90, %s91
    %p105 = scmp.eq.s32.totalorder %s15, 1
    %p106 = por %p104, %p105
    %p108 = scmp.ne.s32.totalorder %s91, %s107
    %p109 = scmp.eq.s32.totalorder %s15, 0
    %p110 = por %p108, %p109
    %p111 = scmp.le.s32.totalorder 1, %s9
    %p112 = scmp.lt.s32.totalorder %s9, 3
    %p113 = pnand %p111, %p112
    %p114 = pneg %p113
    // Predicated region
    $region9: #{upconv2d.1} parent=5 // pred_check
      _
    $region10: #{upconv2d.1} parent=5 // pred_check_branch
      %116 = sbr.rel (%p113) target = $region12
    $region11: #{upconv2d.1} parent=5 // pred_region
      %s117 = ssub.s32 %s9, 1
      // Predicated region
      $region13: #{upconv2d.1} parent=11 // pred_check
        %p118 = pneg %p56
      $region14: #{upconv2d.1} parent=11 // pred_check_branch
        %120 = sbr.rel (%p118) target = $region16
      $region15: #{upconv2d.1} parent=11 // pred_region
        _
      $region16: #{upconv2d.1} parent=11 // pred_fallthru
        _
      // Predicated region
      $region17: #{upconv2d.1} parent=11 // pred_check
        %p121 = pneg %p77
      $region18: #{upconv2d.1} parent=11 // pred_check_branch
        %123 = sbr.rel (%p121) target = $region20
      $region19: #{upconv2d.1} parent=11 // pred_region
        _
      $region20: #{upconv2d.1} parent=11 // pred_fallthru
        _
    $region12: #{upconv2d.1} parent=5 // pred_fallthru
      _
    %p124 = scmp.lt.s32.totalorder %s9, 2
    // Predicated region
    $region21: #{upconv2d.1} parent=5 // pred_check
      %p125 = pneg %p124
    $region22: #{upconv2d.1} parent=5 // pred_check_branch
      %127 = sbr.rel (%p125) target = $region24
    $region23: #{upconv2d.1} parent=5 // pred_region
      // Predicated region
      $region25: #{upconv2d.1} parent=23 // pred_check
        %p128 = pneg %p29
      $region26: #{upconv2d.1} parent=23 // pred_check_branch
        %130 = sbr.rel (%p128) target = $region28
      $region27: #{upconv2d.1} parent=23 // pred_region
        %p131 = scmp.lt.s32.totalorder %s9, 1
        %s132 = scalar_select %p131, %s9, 1
        %s133 = smul.addr %s132, 10
        %s134 = smul.addr %s133, 2
        %s135 = scalar_lea.vmem %s0, %s134
      $region28: #{upconv2d.1} parent=23 // pred_fallthru
        _
    $region24: #{upconv2d.1} parent=5 // pred_fallthru
      _
    %p136 = scmp.le.s32.totalorder 1, %s9
    %p137 = scmp.lt.s32.totalorder %s9, 3
    %p138 = pnand %p136, %p137
    %p139 = pneg %p138
    // Predicated region
    $region29: #{upconv2d.1} parent=5 // pred_check
      _
    $region30: #{upconv2d.1} parent=5 // pred_check_branch
      %141 = sbr.rel (%p138) target = $region32
    $region31: #{upconv2d.1} parent=5 // pred_region
      %s142 = ssub.s32 %s9, 1
      %p143 = scmp.lt.s32.totalorder %s14, 1
      %s144 = scalar_select %p143, %s14, 1
      %s145 = smul.addr %s144, 10
      %s146 = smul.addr %s145, 2
      %s147 = scalar_lea.vmem %s0, %s146
      %p148 = pneg %p35
      %p149 = pneg %p32
      %p150 = pneg %p56
      %p151 = pneg %p53
      %p152 = pneg %p77
      %p153 = pneg %p74
      %p154 = pneg %p103
      %p155 = pneg %p100
      %p156 = scmp.lt.s32.totalorder %s14, 1
      %s157 = scalar_select %p156, %s14, 1
      %s158 = smul.addr %s157, 9
      %s159 = smul.addr %s158, 8
      %s160 = scalar_lea.vmem %s3, %s159
      %p161 = scmp.lt.s32.totalorder %s14, 1
      %s162 = scalar_select %p161, %s14, 1
      %s163 = smul.addr %s162, 10
      %s164 = smul.addr %s163, 2
      %s165 = scalar_lea.vmem %s0, %s164
      %p166 = scmp.lt.s32.totalorder %s14, 1
      %s167 = scalar_select %p166, %s14, 1
      %s168 = smul.addr %s167, 9
      %s169 = smul.addr %s168, 8
      %s170 = scalar_lea.vmem %s3, %s169
      %v172 = vld [vmem:[%s165] sm:$0xff]
      %v173 = vld [vmem:[%s165 + $0x8] sm:$0xff]
      %v174 = vld [vmem:[%s165 + $0x10] sm:$0x3]
      %v175 = vld [vmem:[%s1] sm:$0xf]
      %s176 = scalar_lea.vmem %s1, 4
      %v177 = vld [vmem:[%s176] sm:$0xf]
      %179 = vst [vmem:[#allocation1] ss:$4 sm:$0xff] %v172
      %s181 = scalar_lea.vmem [#allocation1], 32
      %182 = vst [vmem:[%s181] ss:$4 sm:$0xff] %v173
      %v183 = vld.sshfl [vmem:[#allocation1] sm:$0xff pattern:$0x73625140]
      %v185 = vld.sshfl [vmem:[#allocation1 + $0x8] sm:$0xff pattern:$0x73625140]
      %v187 = vld.sshfl [vmem:[#allocation1 + $0x10] sm:$0xff pattern:$0x73625140]
      %v189 = vld.sshfl [vmem:[#allocation1 + $0x18] sm:$0xff pattern:$0x73625140]
      %v191 = vld.sshfl [vmem:[#allocation1 + $0x20] sm:$0xff pattern:$0x73625140]
      %v193 = vld.sshfl [vmem:[#allocation1 + $0x28] sm:$0xff pattern:$0x73625140]
      %v195 = vld.sshfl [vmem:[#allocation1 + $0x30] sm:$0xff pattern:$0x73625140]
      %v197 = vld.sshfl [vmem:[#allocation1 + $0x38] sm:$0xff pattern:$0x73625140]
      %200 = vst [vmem:[#allocation1] ss:$4 sm:$0xff] %v174
      %v201 = vld.sshfl [vmem:[#allocation1] sm:$0xff pattern:$0x73625140]
      %203 = vrot.lane.b32.xlu0 %v183, 127
      %v204 = vpop.permute.xlu0 %203
      %205 = vrot.lane.b32.xlu0 %v185, 127
      %v206 = vpop.permute.xlu0 %205
      %207 = vrot.lane.b32.xlu0 %v187, 127
      %v208 = vpop.permute.xlu0 %207
      %209 = vrot.lane.b32.xlu0 %v189, 127
      %v210 = vpop.permute.xlu0 %209
      %211 = vrot.lane.b32.xlu0 %v191, 127
      %v212 = vpop.permute.xlu0 %211
      %213 = vrot.lane.b32.xlu0 %v193, 127
      %v214 = vpop.permute.xlu0 %213
      %215 = vrot.lane.b32.xlu0 %v195, 127
      %v216 = vpop.permute.xlu0 %215
      %217 = vrot.lane.b32.xlu0 %v197, 127
      %v218 = vpop.permute.xlu0 %217
      %219 = vrot.lane.b32.xlu0 %v201, 127
      %v220 = vpop.permute.xlu0 %219
      %vm221 = vcmask 1039360
      %v222 = vsel %vm221, %v204, %v206
      %v223 = vsel %vm221, %v206, %v208
      %v224 = vsel %vm221, %v208, %v210
      %v225 = vsel %vm221, %v210, %v212
      %v226 = vsel %vm221, %v212, %v214
      %v227 = vsel %vm221, %v214, %v216
      %v228 = vsel %vm221, %v216, %v218
      %v229 = vsel %vm221, %v218, %v220
      %vm230 = vcmask 31744
      %v232 = vsel %vm230, %v177, 0
      %vm234 = vcmask 1041408
      %v236 = vsel %vm234, %v222, 0
      %v239 = vsel %vm234, %v223, 0
      %v242 = vsel %vm234, %v224, 0
      %v245 = vsel %vm234, %v225, 0
      %v248 = vsel %vm234, %v226, 0
      %v251 = vsel %vm234, %v227, 0
      %v254 = vsel %vm234, %v228, 0
      %v257 = vsel %vm234, %v229, 0
      %v260 = vsel %vm234, %v220, 0
      %262 = vmatpush.bf16.msra.mxu0 0
      %263 = vmatpush.bf16.msra.mxu0 0
      %264 = vmatpush.bf16.msra.mxu0 0
      %265 = vmatpush.bf16.msra.mxu0 0
      %266 = vmatpush.bf16.msra.mxu0 0
      %267 = vmatpush.bf16.msra.mxu0 0
      %268 = vmatpush.bf16.msra.mxu0 0
      %269 = vmatpush.bf16.msra.mxu0 %v236
      %270 = vmatmul.bf16.gmra.mxu0 %v232
      %v271 = vpop.f32.mrf.mxu0
      %v272 = vadd.f32 0.0, %v271
      %v273 = vpop.f32.mrf.mxu0
      %274 = vdwg.mxu0
      %275 = vmatpush.bf16.msra.mxu0 0
      %276 = vmatpush.bf16.msra.mxu0 0
      %277 = vmatpush.bf16.msra.mxu0 0
      %278 = vmatpush.bf16.msra.mxu0 0
      %279 = vmatpush.bf16.msra.mxu0 0
      %280 = vmatpush.bf16.msra.mxu0 0
      %281 = vmatpush.bf16.msra.mxu0 0
      %282 = vmatpush.bf16.msra.mxu0 %v239
      %283 = vmatmul.bf16.gmra.mxu0 %v232
      %v284 = vpop.f32.mrf.mxu0
      %v285 = vadd.f32 0.0, %v284
      %v286 = vpop.f32.mrf.mxu0
      %287 = vdwg.mxu0
      %288 = vmatpush.bf16.msra.mxu0 0
      %289 = vmatpush.bf16.msra.mxu0 0
      %290 = vmatpush.bf16.msra.mxu0 0
      %291 = vmatpush.bf16.msra.mxu0 0
      %292 = vmatpush.bf16.msra.mxu0 0
      %293 = vmatpush.bf16.msra.mxu0 0
      %294 = vmatpush.bf16.msra.mxu0 0
      %295 = vmatpush.bf16.msra.mxu0 %v242
      %296 = vmatmul.bf16.gmra.mxu0 %v232
      %v297 = vpop.f32.mrf.mxu0
      %v298 = vadd.f32 0.0, %v297
      %v299 = vpop.f32.mrf.mxu0
      %300 = vdwg.mxu0
      %301 = vmatpush.bf16.msra.mxu0 0
      %302 = vmatpush.bf16.msra.mxu0 0
      %303 = vmatpush.bf16.msra.mxu0 0
      %304 = vmatpush.bf16.msra.mxu0 0
      %305 = vmatpush.bf16.msra.mxu0 0
      %306 = vmatpush.bf16.msra.mxu0 0
      %307 = vmatpush.bf16.msra.mxu0 0
      %308 = vmatpush.bf16.msra.mxu0 %v245
      %309 = vmatmul.bf16.gmra.mxu0 %v232
      %v310 = vpop.f32.mrf.mxu0
      %v311 = vadd.f32 0.0, %v310
      %v312 = vpop.f32.mrf.mxu0
      %313 = vdwg.mxu0
      %314 = vmatpush.bf16.msra.mxu0 0
      %315 = vmatpush.bf16.msra.mxu0 0
      %316 = vmatpush.bf16.msra.mxu0 0
      %317 = vmatpush.bf16.msra.mxu0 0
      %318 = vmatpush.bf16.msra.mxu0 0
      %319 = vmatpush.bf16.msra.mxu0 0
      %320 = vmatpush.bf16.msra.mxu0 0
      %321 = vmatpush.bf16.msra.mxu0 %v248
      %322 = vmatmul.bf16.gmra.mxu0 %v232
      %v323 = vpop.f32.mrf.mxu0
      %v324 = vadd.f32 0.0, %v323
      %v325 = vpop.f32.mrf.mxu0
      %326 = vdwg.mxu0
      %327 = vmatpush.bf16.msra.mxu0 0
      %328 = vmatpush.bf16.msra.mxu0 0
      %329 = vmatpush.bf16.msra.mxu0 0
      %330 = vmatpush.bf16.msra.mxu0 0
      %331 = vmatpush.bf16.msra.mxu0 0
      %332 = vmatpush.bf16.msra.mxu0 0
      %333 = vmatpush.bf16.msra.mxu0 0
      %334 = vmatpush.bf16.msra.mxu0 %v251
      %335 = vmatmul.bf16.gmra.mxu0 %v232
      %v336 = vpop.f32.mrf.mxu0
      %v337 = vadd.f32 0.0, %v336
      %v338 = vpop.f32.mrf.mxu0
      %339 = vdwg.mxu0
      %340 = vmatpush.bf16.msra.mxu0 0
      %341 = vmatpush.bf16.msra.mxu0 0
      %342 = vmatpush.bf16.msra.mxu0 0
      %343 = vmatpush.bf16.msra.mxu0 0
      %344 = vmatpush.bf16.msra.mxu0 0
      %345 = vmatpush.bf16.msra.mxu0 0
      %346 = vmatpush.bf16.msra.mxu0 0
      %347 = vmatpush.bf16.msra.mxu0 %v254
      %348 = vmatmul.bf16.gmra.mxu0 %v232
      %v349 = vpop.f32.mrf.mxu0
      %v350 = vadd.f32 0.0, %v349
      %v351 = vpop.f32.mrf.mxu0
      %352 = vdwg.mxu0
      %353 = vmatpush.bf16.msra.mxu0 0
      %354 = vmatpush.bf16.msra.mxu0 0
      %355 = vmatpush.bf16.msra.mxu0 0
      %356 = vmatpush.bf16.msra.mxu0 0
      %357 = vmatpush.bf16.msra.mxu0 0
      %358 = vmatpush.bf16.msra.mxu0 0
      %359 = vmatpush.bf16.msra.mxu0 0
      %360 = vmatpush.bf16.msra.mxu0 %v257
      %361 = vmatmul.bf16.gmra.mxu0 %v232
      %v362 = vpop.f32.mrf.mxu0
      %v363 = vadd.f32 0.0, %v362
      %v364 = vpop.f32.mrf.mxu0
      %365 = vdwg.mxu0
      %366 = vmatpush.bf16.msra.mxu0 0
      %367 = vmatpush.bf16.msra.mxu0 0
      %368 = vmatpush.bf16.msra.mxu0 0
      %369 = vmatpush.bf16.msra.mxu0 0
      %370 = vmatpush.bf16.msra.mxu0 0
      %371 = vmatpush.bf16.msra.mxu0 0
      %372 = vmatpush.bf16.msra.mxu0 0
      %373 = vmatpush.bf16.msra.mxu0 %v260
      %374 = vmatmul.bf16.gmra.mxu0 %v232
      %v375 = vpop.f32.mrf.mxu0
      %v376 = vadd.f32 0.0, %v375
      %v377 = vpop.f32.mrf.mxu0
      %378 = vdwg.mxu0
      %379 = vst [vmem:[#allocation1] ss:$4 sm:$0xff] %v172
      %s380 = scalar_lea.vmem [#allocation1], 32
      %381 = vst [vmem:[%s380] ss:$4 sm:$0xff] %v173
      %v382 = vld.sshfl [vmem:[#allocation1] sm:$0xff pattern:$0x73625140]
      %v383 = vld.sshfl [vmem:[#allocation1 + $0x8] sm:$0xff pattern:$0x73625140]
      %v384 = vld.sshfl [vmem:[#allocation1 + $0x10] sm:$0xff pattern:$0x73625140]
      %v385 = vld.sshfl [vmem:[#allocation1 + $0x18] sm:$0xff pattern:$0x73625140]
      %v386 = vld.sshfl [vmem:[#allocation1 + $0x20] sm:$0xff pattern:$0x73625140]
      %v387 = vld.sshfl [vmem:[#allocation1 + $0x28] sm:$0xff pattern:$0x73625140]
      %v388 = vld.sshfl [vmem:[#allocation1 + $0x30] sm:$0xff pattern:$0x73625140]
      %v389 = vld.sshfl [vmem:[#allocation1 + $0x38] sm:$0xff pattern:$0x73625140]
      %390 = vst [vmem:[#allocation1] ss:$4 sm:$0xff] %v174
      %v391 = vld.sshfl [vmem:[#allocation1] sm:$0xff pattern:$0x73625140]
      %v393 = vsel %vm230, %v175, 0
      %v395 = vsel %vm234, %v382, 0
      %v397 = vsel %vm234, %v383, 0
      %v399 = vsel %vm234, %v384, 0
      %v401 = vsel %vm234, %v385, 0
      %v403 = vsel %vm234, %v386, 0
      %v405 = vsel %vm234, %v387, 0
      %v407 = vsel %vm234, %v388, 0
      %v409 = vsel %vm234, %v389, 0
      %v411 = vsel %vm234, %v391, 0
      %413 = vmatpush.bf16.msra.mxu0 0
      %414 = vmatpush.bf16.msra.mxu0 0
      %415 = vmatpush.bf16.msra.mxu0 0
      %416 = vmatpush.bf16.msra.mxu0 0
      %417 = vmatpush.bf16.msra.mxu0 0
      %418 = vmatpush.bf16.msra.mxu0 0
      %419 = vmatpush.bf16.msra.mxu0 0
      %420 = vmatpush.bf16.msra.mxu0 %v395
      %421 = vmatmul.bf16.gmra.mxu0 %v393
      %v422 = vpop.f32.mrf.mxu0
      %v423 = vadd.f32 %v272, %v422
      %v424 = vpop.f32.mrf.mxu0
      %425 = vdwg.mxu0
      %426 = vmatpush.bf16.msra.mxu0 0
      %427 = vmatpush.bf16.msra.mxu0 0
      %428 = vmatpush.bf16.msra.mxu0 0
      %429 = vmatpush.bf16.msra.mxu0 0
      %430 = vmatpush.bf16.msra.mxu0 0
      %431 = vmatpush.bf16.msra.mxu0 0
      %432 = vmatpush.bf16.msra.mxu0 0
      %433 = vmatpush.bf16.msra.mxu0 %v397
      %434 = vmatmul.bf16.gmra.mxu0 %v393
      %v435 = vpop.f32.mrf.mxu0
      %v436 = vadd.f32 %v285, %v435
      %v437 = vpop.f32.mrf.mxu0
      %438 = vdwg.mxu0
      %439 = vmatpush.bf16.msra.mxu0 0
      %440 = vmatpush.bf16.msra.mxu0 0
      %441 = vmatpush.bf16.msra.mxu0 0
      %442 = vmatpush.bf16.msra.mxu0 0
      %443 = vmatpush.bf16.msra.mxu0 0
      %444 = vmatpush.bf16.msra.mxu0 0
      %445 = vmatpush.bf16.msra.mxu0 0
      %446 = vmatpush.bf16.msra.mxu0 %v399
      %447 = vmatmul.bf16.gmra.mxu0 %v393
      %v448 = vpop.f32.mrf.mxu0
      %v449 = vadd.f32 %v298, %v448
      %v450 = vpop.f32.mrf.mxu0
      %451 = vdwg.mxu0
      %452 = vmatpush.bf16.msra.mxu0 0
      %453 = vmatpush.bf16.msra.mxu0 0
      %454 = vmatpush.bf16.msra.mxu0 0
      %455 = vmatpush.bf16.msra.mxu0 0
      %456 = vmatpush.bf16.msra.mxu0 0
      %457 = vmatpush.bf16.msra.mxu0 0
      %458 = vmatpush.bf16.msra.mxu0 0
      %459 = vmatpush.bf16.msra.mxu0 %v401
      %460 = vmatmul.bf16.gmra.mxu0 %v393
      %v461 = vpop.f32.mrf.mxu0
      %v462 = vadd.f32 %v311, %v461
      %v463 = vpop.f32.mrf.mxu0
      %464 = vdwg.mxu0
      %465 = vmatpush.bf16.msra.mxu0 0
      %466 = vmatpush.bf16.msra.mxu0 0
      %467 = vmatpush.bf16.msra.mxu0 0
      %468 = vmatpush.bf16.msra.mxu0 0
      %469 = vmatpush.bf16.msra.mxu0 0
      %470 = vmatpush.bf16.msra.mxu0 0
      %471 = vmatpush.bf16.msra.mxu0 0
      %472 = vmatpush.bf16.msra.mxu0 %v403
      %473 = vmatmul.bf16.gmra.mxu0 %v393
      %v474 = vpop.f32.mrf.mxu0
      %v475 = vadd.f32 %v324, %v474
      %v476 = vpop.f32.mrf.mxu0
      %477 = vdwg.mxu0
      %478 = vmatpush.bf16.msra.mxu0 0
      %479 = vmatpush.bf16.msra.mxu0 0
      %480 = vmatpush.bf16.msra.mxu0 0
      %481 = vmatpush.bf16.msra.mxu0 0
      %482 = vmatpush.bf16.msra.mxu0 0
      %483 = vmatpush.bf16.msra.mxu0 0
      %484 = vmatpush.bf16.msra.mxu0 0
      %485 = vmatpush.bf16.msra.mxu0 %v405
      %486 = vmatmul.bf16.gmra.mxu0 %v393
      %v487 = vpop.f32.mrf.mxu0
      %v488 = vadd.f32 %v337, %v487
      %v489 = vpop.f32.mrf.mxu0
      %490 = vdwg.mxu0
      %491 = vmatpush.bf16.msra.mxu0 0
      %492 = vmatpush.bf16.msra.mxu0 0
      %493 = vmatpush.bf16.msra.mxu0 0
      %494 = vmatpush.bf16.msra.mxu0 0
      %495 = vmatpush.bf16.msra.mxu0 0
      %496 = vmatpush.bf16.msra.mxu0 0
      %497 = vmatpush.bf16.msra.mxu0 0
      %498 = vmatpush.bf16.msra.mxu0 %v407
      %499 = vmatmul.bf16.gmra.mxu0 %v393
      %v500 = vpop.f32.mrf.mxu0
      %v501 = vadd.f32 %v350, %v500
      %v502 = vpop.f32.mrf.mxu0
      %503 = vdwg.mxu0
      %504 = vmatpush.bf16.msra.mxu0 0
      %505 = vmatpush.bf16.msra.mxu0 0
      %506 = vmatpush.bf16.msra.mxu0 0
      %507 = vmatpush.bf16.msra.mxu0 0
      %508 = vmatpush.bf16.msra.mxu0 0
      %509 = vmatpush.bf16.msra.mxu0 0
      %510 = vmatpush.bf16.msra.mxu0 0
      %511 = vmatpush.bf16.msra.mxu0 %v409
      %512 = vmatmul.bf16.gmra.mxu0 %v393
      %v513 = vpop.f32.mrf.mxu0
      %v514 = vadd.f32 %v363, %v513
      %v515 = vpop.f32.mrf.mxu0
      %516 = vdwg.mxu0
      %517 = vmatpush.bf16.msra.mxu0 0
      %518 = vmatpush.bf16.msra.mxu0 0
      %519 = vmatpush.bf16.msra.mxu0 0
      %520 = vmatpush.bf16.msra.mxu0 0
      %521 = vmatpush.bf16.msra.mxu0 0
      %522 = vmatpush.bf16.msra.mxu0 0
      %523 = vmatpush.bf16.msra.mxu0 0
      %524 = vmatpush.bf16.msra.mxu0 %v411
      %525 = vmatmul.bf16.gmra.mxu0 %v393
      %v526 = vpop.f32.mrf.mxu0
      %v527 = vadd.f32 %v376, %v526
      %v528 = vpop.f32.mrf.mxu0
      %529 = vdwg.mxu0
      %v530 = vld [vmem:[%s165] sm:$0xff]
      %v531 = vld [vmem:[%s165 + $0x8] sm:$0xff]
      %v532 = vld [vmem:[%s165 + $0x10] sm:$0x3]
      %s533 = scalar_lea.vmem %s1, 8
      %v534 = vld [vmem:[%s533] sm:$0xf]
      %536 = vst [vmem:[#allocation1] ss:$4 sm:$0xff] %v530
      %s538 = scalar_lea.vmem [#allocation1], 32
      %539 = vst [vmem:[%s538] ss:$4 sm:$0xff] %v531
      %v540 = vld.sshfl [vmem:[#allocation1] sm:$0xff pattern:$0x73625140]
      %v542 = vld.sshfl [vmem:[#allocation1 + $0x8] sm:$0xff pattern:$0x73625140]
      %v544 = vld.sshfl [vmem:[#allocation1 + $0x10] sm:$0xff pattern:$0x73625140]
      %v546 = vld.sshfl [vmem:[#allocation1 + $0x18] sm:$0xff pattern:$0x73625140]
      %v548 = vld.sshfl [vmem:[#allocation1 + $0x20] sm:$0xff pattern:$0x73625140]
      %v550 = vld.sshfl [vmem:[#allocation1 + $0x28] sm:$0xff pattern:$0x73625140]
      %v552 = vld.sshfl [vmem:[#allocation1 + $0x30] sm:$0xff pattern:$0x73625140]
      %v554 = vld.sshfl [vmem:[#allocation1 + $0x38] sm:$0xff pattern:$0x73625140]
      %557 = vst [vmem:[#allocation1] ss:$4 sm:$0xff] %v532
      %v558 = vld.sshfl [vmem:[#allocation1] sm:$0xff pattern:$0x73625140]
      %560 = vrot.lane.b32.xlu0 %v540, 126
      %v561 = vpop.permute.xlu0 %560
      %562 = vrot.lane.b32.xlu0 %v542, 126
      %v563 = vpop.permute.xlu0 %562
      %564 = vrot.lane.b32.xlu0 %v544, 126
      %v565 = vpop.permute.xlu0 %564
      %566 = vrot.lane.b32.xlu0 %v546, 126
      %v567 = vpop.permute.xlu0 %566
      %568 = vrot.lane.b32.xlu0 %v548, 126
      %v569 = vpop.permute.xlu0 %568
      %570 = vrot.lane.b32.xlu0 %v550, 126
      %v571 = vpop.permute.xlu0 %570
      %572 = vrot.lane.b32.xlu0 %v552, 126
      %v573 = vpop.permute.xlu0 %572
      %574 = vrot.lane.b32.xlu0 %v554, 126
      %v575 = vpop.permute.xlu0 %574
      %576 = vrot.lane.b32.xlu0 %v558, 126
      %v577 = vpop.permute.xlu0 %576
      %vm578 = vcmask 1031168
      %v579 = vsel %vm578, %v561, %v563
      %v580 = vsel %vm578, %v563, %v565
      %v581 = vsel %vm578, %v565, %v567
      %v582 = vsel %vm578, %v567, %v569
      %v583 = vsel %vm578, %v569, %v571
      %v584 = vsel %vm578, %v571, %v573
      %v585 = vsel %vm578, %v573, %v575
      %v586 = vsel %vm578, %v575, %v577
      %v588 = vsel %vm230, %v534, 0
      %v591 = vsel %vm234, %v579, 0
      %v594 = vsel %vm234, %v580, 0
      %v597 = vsel %vm234, %v581, 0
      %v600 = vsel %vm234, %v582, 0
      %v603 = vsel %vm234, %v583, 0
      %v606 = vsel %vm234, %v584, 0
      %v609 = vsel %vm234, %v585, 0
      %v612 = vsel %vm234, %v586, 0
      %v615 = vsel %vm234, %v577, 0
      %617 = vmatpush.bf16.msra.mxu0 0
      %618 = vmatpush.bf16.msra.mxu0 0
      %619 = vmatpush.bf16.msra.mxu0 0
      %620 = vmatpush.bf16.msra.mxu0 0
      %621 = vmatpush.bf16.msra.mxu0 0
      %622 = vmatpush.bf16.msra.mxu0 0
      %623 = vmatpush.bf16.msra.mxu0 0
      %624 = vmatpush.bf16.msra.mxu0 %v591
      %625 = vmatmul.bf16.gmra.mxu0 %v588
      %v626 = vpop.f32.mrf.mxu0
      %v627 = vadd.f32 0.0, %v626
      %v628 = vpop.f32.mrf.mxu0
      %629 = vdwg.mxu0
      %630 = vmatpush.bf16.msra.mxu0 0
      %631 = vmatpush.bf16.msra.mxu0 0
      %632 = vmatpush.bf16.msra.mxu0 0
      %633 = vmatpush.bf16.msra.mxu0 0
      %634 = vmatpush.bf16.msra.mxu0 0
      %635 = vmatpush.bf16.msra.mxu0 0
      %636 = vmatpush.bf16.msra.mxu0 0
      %637 = vmatpush.bf16.msra.mxu0 %v594
      %638 = vmatmul.bf16.gmra.mxu0 %v588
      %v639 = vpop.f32.mrf.mxu0
      %v640 = vadd.f32 0.0, %v639
      %v641 = vpop.f32.mrf.mxu0
      %642 = vdwg.mxu0
      %643 = vmatpush.bf16.msra.mxu0 0
      %644 = vmatpush.bf16.msra.mxu0 0
      %645 = vmatpush.bf16.msra.mxu0 0
      %646 = vmatpush.bf16.msra.mxu0 0
      %647 = vmatpush.bf16.msra.mxu0 0
      %648 = vmatpush.bf16.msra.mxu0 0
      %649 = vmatpush.bf16.msra.mxu0 0
      %650 = vmatpush.bf16.msra.mxu0 %v597
      %651 = vmatmul.bf16.gmra.mxu0 %v588
      %v652 = vpop.f32.mrf.mxu0
      %v653 = vadd.f32 0.0, %v652
      %v654 = vpop.f32.mrf.mxu0
      %655 = vdwg.mxu0
      %656 = vmatpush.bf16.msra.mxu0 0
      %657 = vmatpush.bf16.msra.mxu0 0
      %658 = vmatpush.bf16.msra.mxu0 0
      %659 = vmatpush.bf16.msra.mxu0 0
      %660 = vmatpush.bf16.msra.mxu0 0
      %661 = vmatpush.bf16.msra.mxu0 0
      %662 = vmatpush.bf16.msra.mxu0 0
      %663 = vmatpush.bf16.msra.mxu0 %v600
      %664 = vmatmul.bf16.gmra.mxu0 %v588
      %v665 = vpop.f32.mrf.mxu0
      %v666 = vadd.f32 0.0, %v665
      %v667 = vpop.f32.mrf.mxu0
      %668 = vdwg.mxu0
      %669 = vmatpush.bf16.msra.mxu0 0
      %670 = vmatpush.bf16.msra.mxu0 0
      %671 = vmatpush.bf16.msra.mxu0 0
      %672 = vmatpush.bf16.msra.mxu0 0
      %673 = vmatpush.bf16.msra.mxu0 0
      %674 = vmatpush.bf16.msra.mxu0 0
      %675 = vmatpush.bf16.msra.mxu0 0
      %676 = vmatpush.bf16.msra.mxu0 %v603
      %677 = vmatmul.bf16.gmra.mxu0 %v588
      %v678 = vpop.f32.mrf.mxu0
      %v679 = vadd.f32 0.0, %v678
      %v680 = vpop.f32.mrf.mxu0
      %681 = vdwg.mxu0
      %682 = vmatpush.bf16.msra.mxu0 0
      %683 = vmatpush.bf16.msra.mxu0 0
      %684 = vmatpush.bf16.msra.mxu0 0
      %685 = vmatpush.bf16.msra.mxu0 0
      %686 = vmatpush.bf16.msra.mxu0 0
      %687 = vmatpush.bf16.msra.mxu0 0
      %688 = vmatpush.bf16.msra.mxu0 0
      %689 = vmatpush.bf16.msra.mxu0 %v606
      %690 = vmatmul.bf16.gmra.mxu0 %v588
      %v691 = vpop.f32.mrf.mxu0
      %v692 = vadd.f32 0.0, %v691
      %v693 = vpop.f32.mrf.mxu0
      %694 = vdwg.mxu0
      %695 = vmatpush.bf16.msra.mxu0 0
      %696 = vmatpush.bf16.msra.mxu0 0
      %697 = vmatpush.bf16.msra.mxu0 0
      %698 = vmatpush.bf16.msra.mxu0 0
      %699 = vmatpush.bf16.msra.mxu0 0
      %700 = vmatpush.bf16.msra.mxu0 0
      %701 = vmatpush.bf16.msra.mxu0 0
      %702 = vmatpush.bf16.msra.mxu0 %v609
      %703 = vmatmul.bf16.gmra.mxu0 %v588
      %v704 = vpop.f32.mrf.mxu0
      %v705 = vadd.f32 0.0, %v704
      %v706 = vpop.f32.mrf.mxu0
      %707 = vdwg.mxu0
      %708 = vmatpush.bf16.msra.mxu0 0
      %709 = vmatpush.bf16.msra.mxu0 0
      %710 = vmatpush.bf16.msra.mxu0 0
      %711 = vmatpush.bf16.msra.mxu0 0
      %712 = vmatpush.bf16.msra.mxu0 0
      %713 = vmatpush.bf16.msra.mxu0 0
      %714 = vmatpush.bf16.msra.mxu0 0
      %715 = vmatpush.bf16.msra.mxu0 %v612
      %716 = vmatmul.bf16.gmra.mxu0 %v588
      %v717 = vpop.f32.mrf.mxu0
      %v718 = vadd.f32 0.0, %v717
      %v719 = vpop.f32.mrf.mxu0
      %720 = vdwg.mxu0
      %721 = vmatpush.bf16.msra.mxu0 0
      %722 = vmatpush.bf16.msra.mxu0 0
      %723 = vmatpush.bf16.msra.mxu0 0
      %724 = vmatpush.bf16.msra.mxu0 0
      %725 = vmatpush.bf16.msra.mxu0 0
      %726 = vmatpush.bf16.msra.mxu0 0
      %727 = vmatpush.bf16.msra.mxu0 0
      %728 = vmatpush.bf16.msra.mxu0 %v615
      %729 = vmatmul.bf16.gmra.mxu0 %v588
      %v730 = vpop.f32.mrf.mxu0
      %v731 = vadd.f32 0.0, %v730
      %v732 = vpop.f32.mrf.mxu0
      %733 = vdwg.mxu0
      %v734 = vadd.f32 %v423, %v627
      %v735 = vadd.f32 %v436, %v640
      %v736 = vadd.f32 %v449, %v653
      %v737 = vadd.f32 %v462, %v666
      %v738 = vadd.f32 %v475, %v679
      %v739 = vadd.f32 %v488, %v692
      %v740 = vadd.f32 %v501, %v705
      %v741 = vadd.f32 %v514, %v718
      %v742 = vadd.f32 %v527, %v731
      %v743 = vld [vmem:[%s165] sm:$0xff]
      %v744 = vld [vmem:[%s165 + $0x8] sm:$0xff]
      %v745 = vld [vmem:[%s165 + $0x10] sm:$0x3]
      %s746 = scalar_lea.vmem %s1, 12
      %v747 = vld [vmem:[%s746] sm:$0xf]
      %749 = vst [vmem:[#allocation1] ss:$4 sm:$0xff] %v743
      %s751 = scalar_lea.vmem [#allocation1], 32
      %752 = vst [vmem:[%s751] ss:$4 sm:$0xff] %v744
      %v753 = vld.sshfl [vmem:[#allocation1] sm:$0xff pattern:$0x73625140]
      %v755 = vld.sshfl [vmem:[#allocation1 + $0x8] sm:$0xff pattern:$0x73625140]
      %v757 = vld.sshfl [vmem:[#allocation1 + $0x10] sm:$0xff pattern:$0x73625140]
      %v759 = vld.sshfl [vmem:[#allocation1 + $0x18] sm:$0xff pattern:$0x73625140]
      %v761 = vld.sshfl [vmem:[#allocation1 + $0x20] sm:$0xff pattern:$0x73625140]
      %v763 = vld.sshfl [vmem:[#allocation1 + $0x28] sm:$0xff pattern:$0x73625140]
      %v765 = vld.sshfl [vmem:[#allocation1 + $0x30] sm:$0xff pattern:$0x73625140]
      %v767 = vld.sshfl [vmem:[#allocation1 + $0x38] sm:$0xff pattern:$0x73625140]
      %770 = vst [vmem:[#allocation1] ss:$4 sm:$0xff] %v745
      %v771 = vld.sshfl [vmem:[#allocation1] sm:$0xff pattern:$0x73625140]
      %773 = vrot.lane.b32.xlu0 %v753, 94
      %v774 = vpop.permute.xlu0 %773
      %775 = vrot.lane.b32.xlu0 %v755, 94
      %v776 = vpop.permute.xlu0 %775
      %777 = vrot.lane.b32.xlu0 %v757, 94
      %v778 = vpop.permute.xlu0 %777
      %779 = vrot.lane.b32.xlu0 %v759, 94
      %v780 = vpop.permute.xlu0 %779
      %781 = vrot.lane.b32.xlu0 %v761, 94
      %v782 = vpop.permute.xlu0 %781
      %783 = vrot.lane.b32.xlu0 %v763, 94
      %v784 = vpop.permute.xlu0 %783
      %785 = vrot.lane.b32.xlu0 %v765, 94
      %v786 = vpop.permute.xlu0 %785
      %787 = vrot.lane.b32.xlu0 %v767, 94
      %v788 = vpop.permute.xlu0 %787
      %789 = vrot.lane.b32.xlu0 %v771, 94
      %v790 = vpop.permute.xlu0 %789
      %vm791 = vcmask 769024
      %v792 = vsel %vm791, %v774, %v776
      %v793 = vsel %vm791, %v776, %v778
      %v794 = vsel %vm791, %v778, %v780
      %v795 = vsel %vm791, %v780, %v782
      %v796 = vsel %vm791, %v782, %v784
      %v797 = vsel %vm791, %v784, %v786
      %v798 = vsel %vm791, %v786, %v788
      %v799 = vsel %vm791, %v788, %v790
      %v801 = vsel %vm230, %v747, 0
      %v804 = vsel %vm234, %v792, 0
      %v807 = vsel %vm234, %v793, 0
      %v810 = vsel %vm234, %v794, 0
      %v813 = vsel %vm234, %v795, 0
      %v816 = vsel %vm234, %v796, 0
      %v819 = vsel %vm234, %v797, 0
      %v822 = vsel %vm234, %v798, 0
      %v825 = vsel %vm234, %v799, 0
      %v828 = vsel %vm234, %v790, 0
      %830 = vmatpush.bf16.msra.mxu0 0
      %831 = vmatpush.bf16.msra.mxu0 0
      %832 = vmatpush.bf16.msra.mxu0 0
      %833 = vmatpush.bf16.msra.mxu0 0
      %834 = vmatpush.bf16.msra.mxu0 0
      %835 = vmatpush.bf16.msra.mxu0 0
      %836 = vmatpush.bf16.msra.mxu0 0
      %837 = vmatpush.bf16.msra.mxu0 %v804
      %838 = vmatmul.bf16.gmra.mxu0 %v801
      %v839 = vpop.f32.mrf.mxu0
      %v840 = vadd.f32 0.0, %v839
      %v841 = vpop.f32.mrf.mxu0
      %842 = vdwg.mxu0
      %843 = vmatpush.bf16.msra.mxu0 0
      %844 = vmatpush.bf16.msra.mxu0 0
      %845 = vmatpush.bf16.msra.mxu0 0
      %846 = vmatpush.bf16.msra.mxu0 0
      %847 = vmatpush.bf16.msra.mxu0 0
      %848 = vmatpush.bf16.msra.mxu0 0
      %849 = vmatpush.bf16.msra.mxu0 0
      %850 = vmatpush.bf16.msra.mxu0 %v807
      %851 = vmatmul.bf16.gmra.mxu0 %v801
      %v852 = vpop.f32.mrf.mxu0
      %v853 = vadd.f32 0.0, %v852
      %v854 = vpop.f32.mrf.mxu0
      %855 = vdwg.mxu0
      %856 = vmatpush.bf16.msra.mxu0 0
      %857 = vmatpush.bf16.msra.mxu0 0
      %858 = vmatpush.bf16.msra.mxu0 0
      %859 = vmatpush.bf16.msra.mxu0 0
      %860 = vmatpush.bf16.msra.mxu0 0
      %861 = vmatpush.bf16.msra.mxu0 0
      %862 = vmatpush.bf16.msra.mxu0 0
      %863 = vmatpush.bf16.msra.mxu0 %v810
      %864 = vmatmul.bf16.gmra.mxu0 %v801
      %v865 = vpop.f32.mrf.mxu0
      %v866 = vadd.f32 0.0, %v865
      %v867 = vpop.f32.mrf.mxu0
      %868 = vdwg.mxu0
      %869 = vmatpush.bf16.msra.mxu0 0
      %870 = vmatpush.bf16.msra.mxu0 0
      %871 = vmatpush.bf16.msra.mxu0 0
      %872 = vmatpush.bf16.msra.mxu0 0
      %873 = vmatpush.bf16.msra.mxu0 0
      %874 = vmatpush.bf16.msra.mxu0 0
      %875 = vmatpush.bf16.msra.mxu0 0
      %876 = vmatpush.bf16.msra.mxu0 %v813
      %877 = vmatmul.bf16.gmra.mxu0 %v801
      %v878 = vpop.f32.mrf.mxu0
      %v879 = vadd.f32 0.0, %v878
      %v880 = vpop.f32.mrf.mxu0
      %881 = vdwg.mxu0
      %882 = vmatpush.bf16.msra.mxu0 0
      %883 = vmatpush.bf16.msra.mxu0 0
      %884 = vmatpush.bf16.msra.mxu0 0
      %885 = vmatpush.bf16.msra.mxu0 0
      %886 = vmatpush.bf16.msra.mxu0 0
      %887 = vmatpush.bf16.msra.mxu0 0
      %888 = vmatpush.bf16.msra.mxu0 0
      %889 = vmatpush.bf16.msra.mxu0 %v816
      %890 = vmatmul.bf16.gmra.mxu0 %v801
      %v891 = vpop.f32.mrf.mxu0
      %v892 = vadd.f32 0.0, %v891
      %v893 = vpop.f32.mrf.mxu0
      %894 = vdwg.mxu0
      %895 = vmatpush.bf16.msra.mxu0 0
      %896 = vmatpush.bf16.msra.mxu0 0
      %897 = vmatpush.bf16.msra.mxu0 0
      %898 = vmatpush.bf16.msra.mxu0 0
      %899 = vmatpush.bf16.msra.mxu0 0
      %900 = vmatpush.bf16.msra.mxu0 0
      %901 = vmatpush.bf16.msra.mxu0 0
      %902 = vmatpush.bf16.msra.mxu0 %v819
      %903 = vmatmul.bf16.gmra.mxu0 %v801
      %v904 = vpop.f32.mrf.mxu0
      %v905 = vadd.f32 0.0, %v904
      %v906 = vpop.f32.mrf.mxu0
      %907 = vdwg.mxu0
      %908 = vmatpush.bf16.msra.mxu0 0
      %909 = vmatpush.bf16.msra.mxu0 0
      %910 = vmatpush.bf16.msra.mxu0 0
      %911 = vmatpush.bf16.msra.mxu0 0
      %912 = vmatpush.bf16.msra.mxu0 0
      %913 = vmatpush.bf16.msra.mxu0 0
      %914 = vmatpush.bf16.msra.mxu0 0
      %915 = vmatpush.bf16.msra.mxu0 %v822
      %916 = vmatmul.bf16.gmra.mxu0 %v801
      %v917 = vpop.f32.mrf.mxu0
      %v918 = vadd.f32 0.0, %v917
      %v919 = vpop.f32.mrf.mxu0
      %920 = vdwg.mxu0
      %921 = vmatpush.bf16.msra.mxu0 0
      %922 = vmatpush.bf16.msra.mxu0 0
      %923 = vmatpush.bf16.msra.mxu0 0
      %924 = vmatpush.bf16.msra.mxu0 0
      %925 = vmatpush.bf16.msra.mxu0 0
      %926 = vmatpush.bf16.msra.mxu0 0
      %927 = vmatpush.bf16.msra.mxu0 0
      %928 = vmatpush.bf16.msra.mxu0 %v825
      %929 = vmatmul.bf16.gmra.mxu0 %v801
      %v930 = vpop.f32.mrf.mxu0
      %v931 = vadd.f32 0.0, %v930
      %v932 = vpop.f32.mrf.mxu0
      %933 = vdwg.mxu0
      %934 = vmatpush.bf16.msra.mxu0 0
      %935 = vmatpush.bf16.msra.mxu0 0
      %936 = vmatpush.bf16.msra.mxu0 0
      %937 = vmatpush.bf16.msra.mxu0 0
      %938 = vmatpush.bf16.msra.mxu0 0
      %939 = vmatpush.bf16.msra.mxu0 0
      %940 = vmatpush.bf16.msra.mxu0 0
      %941 = vmatpush.bf16.msra.mxu0 %v828
      %942 = vmatmul.bf16.gmra.mxu0 %v801
      %v943 = vpop.f32.mrf.mxu0
      %v944 = vadd.f32 0.0, %v943
      %v945 = vpop.f32.mrf.mxu0
      %946 = vdwg.mxu0
      %v947 = vadd.f32 %v734, %v840
      %v948 = vadd.f32 %v735, %v853
      %v949 = vadd.f32 %v736, %v866
      %v950 = vadd.f32 %v737, %v879
      %v951 = vadd.f32 %v738, %v892
      %v952 = vadd.f32 %v739, %v905
      %v953 = vadd.f32 %v740, %v918
      %v954 = vadd.f32 %v741, %v931
      %v955 = vadd.f32 %v742, %v944
      %v956 = vld [vmem:[%s165] sm:$0xff]
      %v957 = vld [vmem:[%s165 + $0x8] sm:$0xff]
      %v958 = vld [vmem:[%s165 + $0x10] sm:$0x3]
      %s959 = scalar_lea.vmem %s1, 16
      %v960 = vld [vmem:[%s959] sm:$0xf]
      %962 = vst [vmem:[#allocation1] ss:$4 sm:$0xff] %v956
      %s964 = scalar_lea.vmem [#allocation1], 32
      %965 = vst [vmem:[%s964] ss:$4 sm:$0xff] %v957
      %v966 = vld.sshfl [vmem:[#allocation1] sm:$0xff pattern:$0x73625140]
      %v968 = vld.sshfl [vmem:[#allocation1 + $0x8] sm:$0xff pattern:$0x73625140]
      %v970 = vld.sshfl [vmem:[#allocation1 + $0x10] sm:$0xff pattern:$0x73625140]
      %v972 = vld.sshfl [vmem:[#allocation1 + $0x18] sm:$0xff pattern:$0x73625140]
      %v974 = vld.sshfl [vmem:[#allocation1 + $0x20] sm:$0xff pattern:$0x73625140]
      %v976 = vld.sshfl [vmem:[#allocation1 + $0x28] sm:$0xff pattern:$0x73625140]
      %v978 = vld.sshfl [vmem:[#allocation1 + $0x30] sm:$0xff pattern:$0x73625140]
      %v980 = vld.sshfl [vmem:[#allocation1 + $0x38] sm:$0xff pattern:$0x73625140]
      %983 = vst [vmem:[#allocation1] ss:$4 sm:$0xff] %v958
      %v984 = vld.sshfl [vmem:[#allocation1] sm:$0xff pattern:$0x73625140]
      %986 = vrot.lane.b32.xlu0 %v966, 93
      %v987 = vpop.permute.xlu0 %986
      %988 = vrot.lane.b32.xlu0 %v968, 93
      %v989 = vpop.permute.xlu0 %988
      %990 = vrot.lane.b32.xlu0 %v970, 93
      %v991 = vpop.permute.xlu0 %990
      %992 = vrot.lane.b32.xlu0 %v972, 93
      %v993 = vpop.permute.xlu0 %992
      %994 = vrot.lane.b32.xlu0 %v974, 93
      %v995 = vpop.permute.xlu0 %994
      %996 = vrot.lane.b32.xlu0 %v976, 93
      %v997 = vpop.permute.xlu0 %996
      %998 = vrot.lane.b32.xlu0 %v978, 93
      %v999 = vpop.permute.xlu0 %998
      %1000 = vrot.lane.b32.xlu0 %v980, 93
      %v1001 = vpop.permute.xlu0 %1000
      %1002 = vrot.lane.b32.xlu0 %v984, 93
      %v1003 = vpop.permute.xlu0 %1002
      %vm1004 = vcmask 760832
      %v1005 = vsel %vm1004, %v987, %v989
      %v1006 = vsel %vm1004, %v989, %v991
      %v1007 = vsel %vm1004, %v991, %v993
      %v1008 = vsel %vm1004, %v993, %v995
      %v1009 = vsel %vm1004, %v995, %v997
      %v1010 = vsel %vm1004, %v997, %v999
      %v1011 = vsel %vm1004, %v999, %v1001
      %v1012 = vsel %vm1004, %v1001, %v1003
      %v1014 = vsel %vm230, %v960, 0
      %v1017 = vsel %vm234, %v1005, 0
      %v1020 = vsel %vm234, %v1006, 0
      %v1023 = vsel %vm234, %v1007, 0
      %v1026 = vsel %vm234, %v1008, 0
      %v1029 = vsel %vm234, %v1009, 0
      %v1032 = vsel %vm234, %v1010, 0
      %v1035 = vsel %vm234, %v1011, 0
      %v1038 = vsel %vm234, %v1012, 0
      %v1041 = vsel %vm234, %v1003, 0
      %1043 = vmatpush.bf16.msra.mxu0 0
      %1044 = vmatpush.bf16.msra.mxu0 0
      %1045 = vmatpush.bf16.msra.mxu0 0
      %1046 = vmatpush.bf16.msra.mxu0 0
      %1047 = vmatpush.bf16.msra.mxu0 0
      %1048 = vmatpush.bf16.msra.mxu0 0
      %1049 = vmatpush.bf16.msra.mxu0 0
      %1050 = vmatpush.bf16.msra.mxu0 %v1017
      %1051 = vmatmul.bf16.gmra.mxu0 %v1014
      %v1052 = vpop.f32.mrf.mxu0
      %v1053 = vadd.f32 0.0, %v1052
      %v1054 = vpop.f32.mrf.mxu0
      %1055 = vdwg.mxu0
      %1056 = vmatpush.bf16.msra.mxu0 0
      %1057 = vmatpush.bf16.msra.mxu0 0
      %1058 = vmatpush.bf16.msra.mxu0 0
      %1059 = vmatpush.bf16.msra.mxu0 0
      %1060 = vmatpush.bf16.msra.mxu0 0
      %1061 = vmatpush.bf16.msra.mxu0 0
      %1062 = vmatpush.bf16.msra.mxu0 0
      %1063 = vmatpush.bf16.msra.mxu0 %v1020
      %1064 = vmatmul.bf16.gmra.mxu0 %v1014
      %v1065 = vpop.f32.mrf.mxu0
      %v1066 = vadd.f32 0.0, %v1065
      %v1067 = vpop.f32.mrf.mxu0
      %1068 = vdwg.mxu0
      %1069 = vmatpush.bf16.msra.mxu0 0
      %1070 = vmatpush.bf16.msra.mxu0 0
      %1071 = vmatpush.bf16.msra.mxu0 0
      %1072 = vmatpush.bf16.msra.mxu0 0
      %1073 = vmatpush.bf16.msra.mxu0 0
      %1074 = vmatpush.bf16.msra.mxu0 0
      %1075 = vmatpush.bf16.msra.mxu0 0
      %1076 = vmatpush.bf16.msra.mxu0 %v1023
      %1077 = vmatmul.bf16.gmra.mxu0 %v1014
      %v1078 = vpop.f32.mrf.mxu0
      %v1079 = vadd.f32 0.0, %v1078
      %v1080 = vpop.f32.mrf.mxu0
      %1081 = vdwg.mxu0
      %1082 = vmatpush.bf16.msra.mxu0 0
      %1083 = vmatpush.bf16.msra.mxu0 0
      %1084 = vmatpush.bf16.msra.mxu0 0
      %1085 = vmatpush.bf16.msra.mxu0 0
      %1086 = vmatpush.bf16.msra.mxu0 0
      %1087 = vmatpush.bf16.msra.mxu0 0
      %1088 = vmatpush.bf16.msra.mxu0 0
      %1089 = vmatpush.bf16.msra.mxu0 %v1026
      %1090 = vmatmul.bf16.gmra.mxu0 %v1014
      %v1091 = vpop.f32.mrf.mxu0
      %v1092 = vadd.f32 0.0, %v1091
      %v1093 = vpop.f32.mrf.mxu0
      %1094 = vdwg.mxu0
      %1095 = vmatpush.bf16.msra.mxu0 0
      %1096 = vmatpush.bf16.msra.mxu0 0
      %1097 = vmatpush.bf16.msra.mxu0 0
      %1098 = vmatpush.bf16.msra.mxu0 0
      %1099 = vmatpush.bf16.msra.mxu0 0
      %1100 = vmatpush.bf16.msra.mxu0 0
      %1101 = vmatpush.bf16.msra.mxu0 0
      %1102 = vmatpush.bf16.msra.mxu0 %v1029
      %1103 = vmatmul.bf16.gmra.mxu0 %v1014
      %v1104 = vpop.f32.mrf.mxu0
      %v1105 = vadd.f32 0.0, %v1104
      %v1106 = vpop.f32.mrf.mxu0
      %1107 = vdwg.mxu0
      %1108 = vmatpush.bf16.msra.mxu0 0
      %1109 = vmatpush.bf16.msra.mxu0 0
      %1110 = vmatpush.bf16.msra.mxu0 0
      %1111 = vmatpush.bf16.msra.mxu0 0
      %1112 = vmatpush.bf16.msra.mxu0 0
      %1113 = vmatpush.bf16.msra.mxu0 0
      %1114 = vmatpush.bf16.msra.mxu0 0
      %1115 = vmatpush.bf16.msra.mxu0 %v1032
      %1116 = vmatmul.bf16.gmra.mxu0 %v1014
      %v1117 = vpop.f32.mrf.mxu0
      %v1118 = vadd.f32 0.0, %v1117
      %v1119 = vpop.f32.mrf.mxu0
      %1120 = vdwg.mxu0
      %1121 = vmatpush.bf16.msra.mxu0 0
      %1122 = vmatpush.bf16.msra.mxu0 0
      %1123 = vmatpush.bf16.msra.mxu0 0
      %1124 = vmatpush.bf16.msra.mxu0 0
      %1125 = vmatpush.bf16.msra.mxu0 0
      %1126 = vmatpush.bf16.msra.mxu0 0
      %1127 = vmatpush.bf16.msra.mxu0 0
      %1128 = vmatpush.bf16.msra.mxu0 %v1035
      %1129 = vmatmul.bf16.gmra.mxu0 %v1014
      %v1130 = vpop.f32.mrf.mxu0
      %v1131 = vadd.f32 0.0, %v1130
      %v1132 = vpop.f32.mrf.mxu0
      %1133 = vdwg.mxu0
      %1134 = vmatpush.bf16.msra.mxu0 0
      %1135 = vmatpush.bf16.msra.mxu0 0
      %1136 = vmatpush.bf16.msra.mxu0 0
      %1137 = vmatpush.bf16.msra.mxu0 0
      %1138 = vmatpush.bf16.msra.mxu0 0
      %1139 = vmatpush.bf16.msra.mxu0 0
      %1140 = vmatpush.bf16.msra.mxu0 0
      %1141 = vmatpush.bf16.msra.mxu0 %v1038
      %1142 = vmatmul.bf16.gmra.mxu0 %v1014
      %v1143 = vpop.f32.mrf.mxu0
      %v1144 = vadd.f32 0.0, %v1143
      %v1145 = vpop.f32.mrf.mxu0
      %1146 = vdwg.mxu0
      %1147 = vmatpush.bf16.msra.mxu0 0
      %1148 = vmatpush.bf16.msra.mxu0 0
      %1149 = vmatpush.bf16.msra.mxu0 0
      %1150 = vmatpush.bf16.msra.mxu0 0
      %1151 = vmatpush.bf16.msra.mxu0 0
      %1152 = vmatpush.bf16.msra.mxu0 0
      %1153 = vmatpush.bf16.msra.mxu0 0
      %1154 = vmatpush.bf16.msra.mxu0 %v1041
      %1155 = vmatmul.bf16.gmra.mxu0 %v1014
      %v1156 = vpop.f32.mrf.mxu0
      %v1157 = vadd.f32 0.0, %v1156
      %v1158 = vpop.f32.mrf.mxu0
      %1159 = vdwg.mxu0
      %v1160 = vadd.f32 %v947, %v1053
      %v1161 = vadd.f32 %v948, %v1066
      %v1162 = vadd.f32 %v949, %v1079
      %v1163 = vadd.f32 %v950, %v1092
      %v1164 = vadd.f32 %v951, %v1105
      %v1165 = vadd.f32 %v952, %v1118
      %v1166 = vadd.f32 %v953, %v1131
      %v1167 = vadd.f32 %v954, %v1144
      %v1168 = vadd.f32 %v955, %v1157
      %v1169 = vld [vmem:[%s165] sm:$0xff]
      %v1170 = vld [vmem:[%s165 + $0x8] sm:$0xff]
      %v1171 = vld [vmem:[%s165 + $0x10] sm:$0x3]
      %s1172 = scalar_lea.vmem %s1, 20
      %v1173 = vld [vmem:[%s1172] sm:$0xf]
      %1175 = vst [vmem:[#allocation1] ss:$4 sm:$0xff] %v1169
      %s1177 = scalar_lea.vmem [#allocation1], 32
      %1178 = vst [vmem:[%s1177] ss:$4 sm:$0xff] %v1170
      %v1179 = vld.sshfl [vmem:[#allocation1] sm:$0xff pattern:$0x73625140]
      %v1181 = vld.sshfl [vmem:[#allocation1 + $0x8] sm:$0xff pattern:$0x73625140]
      %v1183 = vld.sshfl [vmem:[#allocation1 + $0x10] sm:$0xff pattern:$0x73625140]
      %v1185 = vld.sshfl [vmem:[#allocation1 + $0x18] sm:$0xff pattern:$0x73625140]
      %v1187 = vld.sshfl [vmem:[#allocation1 + $0x20] sm:$0xff pattern:$0x73625140]
      %v1189 = vld.sshfl [vmem:[#allocation1 + $0x28] sm:$0xff pattern:$0x73625140]
      %v1191 = vld.sshfl [vmem:[#allocation1 + $0x30] sm:$0xff pattern:$0x73625140]
      %v1193 = vld.sshfl [vmem:[#allocation1 + $0x38] sm:$0xff pattern:$0x73625140]
      %1196 = vst [vmem:[#allocation1] ss:$4 sm:$0xff] %v1171
      %v1197 = vld.sshfl [vmem:[#allocation1] sm:$0xff pattern:$0x73625140]
      %1199 = vrot.lane.b32.xlu0 %v1179, 92
      %v1200 = vpop.permute.xlu0 %1199
      %1201 = vrot.lane.b32.xlu0 %v1181, 92
      %v1202 = vpop.permute.xlu0 %1201
      %1203 = vrot.lane.b32.xlu0 %v1183, 92
      %v1204 = vpop.permute.xlu0 %1203
      %1205 = vrot.lane.b32.xlu0 %v1185, 92
      %v1206 = vpop.permute.xlu0 %1205
      %1207 = vrot.lane.b32.xlu0 %v1187, 92
      %v1208 = vpop.permute.xlu0 %1207
      %1209 = vrot.lane.b32.xlu0 %v1189, 92
      %v1210 = vpop.permute.xlu0 %1209
      %1211 = vrot.lane.b32.xlu0 %v1191, 92
      %v1212 = vpop.permute.xlu0 %1211
      %1213 = vrot.lane.b32.xlu0 %v1193, 92
      %v1214 = vpop.permute.xlu0 %1213
      %1215 = vrot.lane.b32.xlu0 %v1197, 92
      %v1216 = vpop.permute.xlu0 %1215
      %vm1217 = vcmask 752640
      %v1218 = vsel %vm1217, %v1200, %v1202
      %v1219 = vsel %vm1217, %v1202, %v1204
      %v1220 = vsel %vm1217, %v1204, %v1206
      %v1221 = vsel %vm1217, %v1206, %v1208
      %v1222 = vsel %vm1217, %v1208, %v1210
      %v1223 = vsel %vm1217, %v1210, %v1212
      %v1224 = vsel %vm1217, %v1212, %v1214
      %v1225 = vsel %vm1217, %v1214, %v1216
      %v1227 = vsel %vm230, %v1173, 0
      %v1230 = vsel %vm234, %v1218, 0
      %v1233 = vsel %vm234, %v1219, 0
      %v1236 = vsel %vm234, %v1220, 0
      %v1239 = vsel %vm234, %v1221, 0
      %v1242 = vsel %vm234, %v1222, 0
      %v1245 = vsel %vm234, %v1223, 0
      %v1248 = vsel %vm234, %v1224, 0
      %v1251 = vsel %vm234, %v1225, 0
      %v1254 = vsel %vm234, %v1216, 0
      %1256 = vmatpush.bf16.msra.mxu0 0
      %1257 = vmatpush.bf16.msra.mxu0 0
      %1258 = vmatpush.bf16.msra.mxu0 0
      %1259 = vmatpush.bf16.msra.mxu0 0
      %1260 = vmatpush.bf16.msra.mxu0 0
      %1261 = vmatpush.bf16.msra.mxu0 0
      %1262 = vmatpush.bf16.msra.mxu0 0
      %1263 = vmatpush.bf16.msra.mxu0 %v1230
      %1264 = vmatmul.bf16.gmra.mxu0 %v1227
      %v1265 = vpop.f32.mrf.mxu0
      %v1266 = vadd.f32 0.0, %v1265
      %v1267 = vpop.f32.mrf.mxu0
      %1268 = vdwg.mxu0
      %1269 = vmatpush.bf16.msra.mxu0 0
      %1270 = vmatpush.bf16.msra.mxu0 0
      %1271 = vmatpush.bf16.msra.mxu0 0
      %1272 = vmatpush.bf16.msra.mxu0 0
      %1273 = vmatpush.bf16.msra.mxu0 0
      %1274 = vmatpush.bf16.msra.mxu0 0
      %1275 = vmatpush.bf16.msra.mxu0 0
      %1276 = vmatpush.bf16.msra.mxu0 %v1233
      %1277 = vmatmul.bf16.gmra.mxu0 %v1227
      %v1278 = vpop.f32.mrf.mxu0
      %v1279 = vadd.f32 0.0, %v1278
      %v1280 = vpop.f32.mrf.mxu0
      %1281 = vdwg.mxu0
      %1282 = vmatpush.bf16.msra.mxu0 0
      %1283 = vmatpush.bf16.msra.mxu0 0
      %1284 = vmatpush.bf16.msra.mxu0 0
      %1285 = vmatpush.bf16.msra.mxu0 0
      %1286 = vmatpush.bf16.msra.mxu0 0
      %1287 = vmatpush.bf16.msra.mxu0 0
      %1288 = vmatpush.bf16.msra.mxu0 0
      %1289 = vmatpush.bf16.msra.mxu0 %v1236
      %1290 = vmatmul.bf16.gmra.mxu0 %v1227
      %v1291 = vpop.f32.mrf.mxu0
      %v1292 = vadd.f32 0.0, %v1291
      %v1293 = vpop.f32.mrf.mxu0
      %1294 = vdwg.mxu0
      %1295 = vmatpush.bf16.msra.mxu0 0
      %1296 = vmatpush.bf16.msra.mxu0 0
      %1297 = vmatpush.bf16.msra.mxu0 0
      %1298 = vmatpush.bf16.msra.mxu0 0
      %1299 = vmatpush.bf16.msra.mxu0 0
      %1300 = vmatpush.bf16.msra.mxu0 0
      %1301 = vmatpush.bf16.msra.mxu0 0
      %1302 = vmatpush.bf16.msra.mxu0 %v1239
      %1303 = vmatmul.bf16.gmra.mxu0 %v1227
      %v1304 = vpop.f32.mrf.mxu0
      %v1305 = vadd.f32 0.0, %v1304
      %v1306 = vpop.f32.mrf.mxu0
      %1307 = vdwg.mxu0
      %1308 = vmatpush.bf16.msra.mxu0 0
      %1309 = vmatpush.bf16.msra.mxu0 0
      %1310 = vmatpush.bf16.msra.mxu0 0
      %1311 = vmatpush.bf16.msra.mxu0 0
      %1312 = vmatpush.bf16.msra.mxu0 0
      %1313 = vmatpush.bf16.msra.mxu0 0
      %1314 = vmatpush.bf16.msra.mxu0 0
      %1315 = vmatpush.bf16.msra.mxu0 %v1242
      %1316 = vmatmul.bf16.gmra.mxu0 %v1227
      %v1317 = vpop.f32.mrf.mxu0
      %v1318 = vadd.f32 0.0, %v1317
      %v1319 = vpop.f32.mrf.mxu0
      %1320 = vdwg.mxu0
      %1321 = vmatpush.bf16.msra.mxu0 0
      %1322 = vmatpush.bf16.msra.mxu0 0
      %1323 = vmatpush.bf16.msra.mxu0 0
      %1324 = vmatpush.bf16.msra.mxu0 0
      %1325 = vmatpush.bf16.msra.mxu0 0
      %1326 = vmatpush.bf16.msra.mxu0 0
      %1327 = vmatpush.bf16.msra.mxu0 0
      %1328 = vmatpush.bf16.msra.mxu0 %v1245
      %1329 = vmatmul.bf16.gmra.mxu0 %v1227
      %v1330 = vpop.f32.mrf.mxu0
      %v1331 = vadd.f32 0.0, %v1330
      %v1332 = vpop.f32.mrf.mxu0
      %1333 = vdwg.mxu0
      %1334 = vmatpush.bf16.msra.mxu0 0
      %1335 = vmatpush.bf16.msra.mxu0 0
      %1336 = vmatpush.bf16.msra.mxu0 0
      %1337 = vmatpush.bf16.msra.mxu0 0
      %1338 = vmatpush.bf16.msra.mxu0 0
      %1339 = vmatpush.bf16.msra.mxu0 0
      %1340 = vmatpush.bf16.msra.mxu0 0
      %1341 = vmatpush.bf16.msra.mxu0 %v1248
      %1342 = vmatmul.bf16.gmra.mxu0 %v1227
      %v1343 = vpop.f32.mrf.mxu0
      %v1344 = vadd.f32 0.0, %v1343
      %v1345 = vpop.f32.mrf.mxu0
      %1346 = vdwg.mxu0
      %1347 = vmatpush.bf16.msra.mxu0 0
      %1348 = vmatpush.bf16.msra.mxu0 0
      %1349 = vmatpush.bf16.msra.mxu0 0
      %1350 = vmatpush.bf16.msra.mxu0 0
      %1351 = vmatpush.bf16.msra.mxu0 0
      %1352 = vmatpush.bf16.msra.mxu0 0
      %1353 = vmatpush.bf16.msra.mxu0 0
      %1354 = vmatpush.bf16.msra.mxu0 %v1251
      %1355 = vmatmul.bf16.gmra.mxu0 %v1227
      %v1356 = vpop.f32.mrf.mxu0
      %v1357 = vadd.f32 0.0, %v1356
      %v1358 = vpop.f32.mrf.mxu0
      %1359 = vdwg.mxu0
      %1360 = vmatpush.bf16.msra.mxu0 0
      %1361 = vmatpush.bf16.msra.mxu0 0
      %1362 = vmatpush.bf16.msra.mxu0 0
      %1363 = vmatpush.bf16.msra.mxu0 0
      %1364 = vmatpush.bf16.msra.mxu0 0
      %1365 = vmatpush.bf16.msra.mxu0 0
      %1366 = vmatpush.bf16.msra.mxu0 0
      %1367 = vmatpush.bf16.msra.mxu0 %v1254
      %1368 = vmatmul.bf16.gmra.mxu0 %v1227
      %v1369 = vpop.f32.mrf.mxu0
      %v1370 = vadd.f32 0.0, %v1369
      %v1371 = vpop.f32.mrf.mxu0
      %1372 = vdwg.mxu0
      %v1373 = vadd.f32 %v1160, %v1266
      %v1374 = vadd.f32 %v1161, %v1279
      %v1375 = vadd.f32 %v1162, %v1292
      %v1376 = vadd.f32 %v1163, %v1305
      %v1377 = vadd.f32 %v1164, %v1318
      %v1378 = vadd.f32 %v1165, %v1331
      %v1379 = vadd.f32 %v1166, %v1344
      %v1380 = vadd.f32 %v1167, %v1357
      %v1381 = vadd.f32 %v1168, %v1370
      %v1382 = vld [vmem:[%s165] sm:$0xff]
      %v1383 = vld [vmem:[%s165 + $0x8] sm:$0xff]
      %v1384 = vld [vmem:[%s165 + $0x10] sm:$0xf]
      %s1385 = scalar_lea.vmem %s1, 24
      %v1386 = vld [vmem:[%s1385] sm:$0xf]
      %1388 = vst [vmem:[#allocation1] ss:$4 sm:$0xff] %v1382
      %s1390 = scalar_lea.vmem [#allocation1], 32
      %1391 = vst [vmem:[%s1390] ss:$4 sm:$0xff] %v1383
      %v1392 = vld.sshfl [vmem:[#allocation1] sm:$0xff pattern:$0x73625140]
      %v1394 = vld.sshfl [vmem:[#allocation1 + $0x8] sm:$0xff pattern:$0x73625140]
      %v1396 = vld.sshfl [vmem:[#allocation1 + $0x10] sm:$0xff pattern:$0x73625140]
      %v1398 = vld.sshfl [vmem:[#allocation1 + $0x18] sm:$0xff pattern:$0x73625140]
      %v1400 = vld.sshfl [vmem:[#allocation1 + $0x20] sm:$0xff pattern:$0x73625140]
      %v1402 = vld.sshfl [vmem:[#allocation1 + $0x28] sm:$0xff pattern:$0x73625140]
      %v1404 = vld.sshfl [vmem:[#allocation1 + $0x30] sm:$0xff pattern:$0x73625140]
      %v1406 = vld.sshfl [vmem:[#allocation1 + $0x38] sm:$0xff pattern:$0x73625140]
      %1409 = vst [vmem:[#allocation1] ss:$4 sm:$0xff] %v1384
      %v1410 = vld.sshfl [vmem:[#allocation1] sm:$0xff pattern:$0x73625140]
      %v1412 = vld.sshfl [vmem:[#allocation1 + $0x8] sm:$0xff pattern:$0x73625140]
      %1414 = vrot.lane.b32.xlu0 %v1392, 60
      %v1415 = vpop.permute.xlu0 %1414
      %1416 = vrot.lane.b32.xlu0 %v1394, 60
      %v1417 = vpop.permute.xlu0 %1416
      %1418 = vrot.lane.b32.xlu0 %v1396, 60
      %v1419 = vpop.permute.xlu0 %1418
      %1420 = vrot.lane.b32.xlu0 %v1398, 60
      %v1421 = vpop.permute.xlu0 %1420
      %1422 = vrot.lane.b32.xlu0 %v1400, 60
      %v1423 = vpop.permute.xlu0 %1422
      %1424 = vrot.lane.b32.xlu0 %v1402, 60
      %v1425 = vpop.permute.xlu0 %1424
      %1426 = vrot.lane.b32.xlu0 %v1404, 60
      %v1427 = vpop.permute.xlu0 %1426
      %1428 = vrot.lane.b32.xlu0 %v1406, 60
      %v1429 = vpop.permute.xlu0 %1428
      %1430 = vrot.lane.b32.xlu0 %v1410, 60
      %v1431 = vpop.permute.xlu0 %1430
      %1432 = vrot.lane.b32.xlu0 %v1412, 60
      %v1433 = vpop.permute.xlu0 %1432
      %vm1434 = vcmask 490496
      %v1435 = vsel %vm1434, %v1415, %v1417
      %v1436 = vsel %vm1434, %v1417, %v1419
      %v1437 = vsel %vm1434, %v1419, %v1421
      %v1438 = vsel %vm1434, %v1421, %v1423
      %v1439 = vsel %vm1434, %v1423, %v1425
      %v1440 = vsel %vm1434, %v1425, %v1427
      %v1441 = vsel %vm1434, %v1427, %v1429
      %v1442 = vsel %vm1434, %v1429, %v1431
      %v1443 = vsel %vm1434, %v1431, %v1433
      %v1445 = vsel %vm230, %v1386, 0
      %v1448 = vsel %vm234, %v1435, 0
      %v1451 = vsel %vm234, %v1436, 0
      %v1454 = vsel %vm234, %v1437, 0
      %v1457 = vsel %vm234, %v1438, 0
      %v1460 = vsel %vm234, %v1439, 0
      %v1463 = vsel %vm234, %v1440, 0
      %v1466 = vsel %vm234, %v1441, 0
      %v1469 = vsel %vm234, %v1442, 0
      %v1472 = vsel %vm234, %v1443, 0
      %1474 = vmatpush.bf16.msra.mxu0 0
      %1475 = vmatpush.bf16.msra.mxu0 0
      %1476 = vmatpush.bf16.msra.mxu0 0
      %1477 = vmatpush.bf16.msra.mxu0 0
      %1478 = vmatpush.bf16.msra.mxu0 0
      %1479 = vmatpush.bf16.msra.mxu0 0
      %1480 = vmatpush.bf16.msra.mxu0 0
      %1481 = vmatpush.bf16.msra.mxu0 %v1448
      %1482 = vmatmul.bf16.gmra.mxu0 %v1445
      %v1483 = vpop.f32.mrf.mxu0
      %v1484 = vadd.f32 0.0, %v1483
      %v1485 = vpop.f32.mrf.mxu0
      %1486 = vdwg.mxu0
      %1487 = vmatpush.bf16.msra.mxu0 0
      %1488 = vmatpush.bf16.msra.mxu0 0
      %1489 = vmatpush.bf16.msra.mxu0 0
      %1490 = vmatpush.bf16.msra.mxu0 0
      %1491 = vmatpush.bf16.msra.mxu0 0
      %1492 = vmatpush.bf16.msra.mxu0 0
      %1493 = vmatpush.bf16.msra.mxu0 0
      %1494 = vmatpush.bf16.msra.mxu0 %v1451
      %1495 = vmatmul.bf16.gmra.mxu0 %v1445
      %v1496 = vpop.f32.mrf.mxu0
      %v1497 = vadd.f32 0.0, %v1496
      %v1498 = vpop.f32.mrf.mxu0
      %1499 = vdwg.mxu0
      %1500 = vmatpush.bf16.msra.mxu0 0
      %1501 = vmatpush.bf16.msra.mxu0 0
      %1502 = vmatpush.bf16.msra.mxu0 0
      %1503 = vmatpush.bf16.msra.mxu0 0
      %1504 = vmatpush.bf16.msra.mxu0 0
      %1505 = vmatpush.bf16.msra.mxu0 0
      %1506 = vmatpush.bf16.msra.mxu0 0
      %1507 = vmatpush.bf16.msra.mxu0 %v1454
      %1508 = vmatmul.bf16.gmra.mxu0 %v1445
      %v1509 = vpop.f32.mrf.mxu0
      %v1510 = vadd.f32 0.0, %v1509
      %v1511 = vpop.f32.mrf.mxu0
      %1512 = vdwg.mxu0
      %1513 = vmatpush.bf16.msra.mxu0 0
      %1514 = vmatpush.bf16.msra.mxu0 0
      %1515 = vmatpush.bf16.msra.mxu0 0
      %1516 = vmatpush.bf16.msra.mxu0 0
      %1517 = vmatpush.bf16.msra.mxu0 0
      %1518 = vmatpush.bf16.msra.mxu0 0
      %1519 = vmatpush.bf16.msra.mxu0 0
      %1520 = vmatpush.bf16.msra.mxu0 %v1457
      %1521 = vmatmul.bf16.gmra.mxu0 %v1445
      %v1522 = vpop.f32.mrf.mxu0
      %v1523 = vadd.f32 0.0, %v1522
      %v1524 = vpop.f32.mrf.mxu0
      %1525 = vdwg.mxu0
      %1526 = vmatpush.bf16.msra.mxu0 0
      %1527 = vmatpush.bf16.msra.mxu0 0
      %1528 = vmatpush.bf16.msra.mxu0 0
      %1529 = vmatpush.bf16.msra.mxu0 0
      %1530 = vmatpush.bf16.msra.mxu0 0
      %1531 = vmatpush.bf16.msra.mxu0 0
      %1532 = vmatpush.bf16.msra.mxu0 0
      %1533 = vmatpush.bf16.msra.mxu0 %v1460
      %1534 = vmatmul.bf16.gmra.mxu0 %v1445
      %v1535 = vpop.f32.mrf.mxu0
      %v1536 = vadd.f32 0.0, %v1535
      %v1537 = vpop.f32.mrf.mxu0
      %1538 = vdwg.mxu0
      %1539 = vmatpush.bf16.msra.mxu0 0
      %1540 = vmatpush.bf16.msra.mxu0 0
      %1541 = vmatpush.bf16.msra.mxu0 0
      %1542 = vmatpush.bf16.msra.mxu0 0
      %1543 = vmatpush.bf16.msra.mxu0 0
      %1544 = vmatpush.bf16.msra.mxu0 0
      %1545 = vmatpush.bf16.msra.mxu0 0
      %1546 = vmatpush.bf16.msra.mxu0 %v1463
      %1547 = vmatmul.bf16.gmra.mxu0 %v1445
      %v1548 = vpop.f32.mrf.mxu0
      %v1549 = vadd.f32 0.0, %v1548
      %v1550 = vpop.f32.mrf.mxu0
      %1551 = vdwg.mxu0
      %1552 = vmatpush.bf16.msra.mxu0 0
      %1553 = vmatpush.bf16.msra.mxu0 0
      %1554 = vmatpush.bf16.msra.mxu0 0
      %1555 = vmatpush.bf16.msra.mxu0 0
      %1556 = vmatpush.bf16.msra.mxu0 0
      %1557 = vmatpush.bf16.msra.mxu0 0
      %1558 = vmatpush.bf16.msra.mxu0 0
      %1559 = vmatpush.bf16.msra.mxu0 %v1466
      %1560 = vmatmul.bf16.gmra.mxu0 %v1445
      %v1561 = vpop.f32.mrf.mxu0
      %v1562 = vadd.f32 0.0, %v1561
      %v1563 = vpop.f32.mrf.mxu0
      %1564 = vdwg.mxu0
      %1565 = vmatpush.bf16.msra.mxu0 0
      %1566 = vmatpush.bf16.msra.mxu0 0
      %1567 = vmatpush.bf16.msra.mxu0 0
      %1568 = vmatpush.bf16.msra.mxu0 0
      %1569 = vmatpush.bf16.msra.mxu0 0
      %1570 = vmatpush.bf16.msra.mxu0 0
      %1571 = vmatpush.bf16.msra.mxu0 0
      %1572 = vmatpush.bf16.msra.mxu0 %v1469
      %1573 = vmatmul.bf16.gmra.mxu0 %v1445
      %v1574 = vpop.f32.mrf.mxu0
      %v1575 = vadd.f32 0.0, %v1574
      %v1576 = vpop.f32.mrf.mxu0
      %1577 = vdwg.mxu0
      %1578 = vmatpush.bf16.msra.mxu0 0
      %1579 = vmatpush.bf16.msra.mxu0 0
      %1580 = vmatpush.bf16.msra.mxu0 0
      %1581 = vmatpush.bf16.msra.mxu0 0
      %1582 = vmatpush.bf16.msra.mxu0 0
      %1583 = vmatpush.bf16.msra.mxu0 0
      %1584 = vmatpush.bf16.msra.mxu0 0
      %1585 = vmatpush.bf16.msra.mxu0 %v1472
      %1586 = vmatmul.bf16.gmra.mxu0 %v1445
      %v1587 = vpop.f32.mrf.mxu0
      %v1588 = vadd.f32 0.0, %v1587
      %v1589 = vpop.f32.mrf.mxu0
      %1590 = vdwg.mxu0
      %v1591 = vadd.f32 %v1373, %v1484
      %v1592 = vadd.f32 %v1374, %v1497
      %v1593 = vadd.f32 %v1375, %v1510
      %v1594 = vadd.f32 %v1376, %v1523
      %v1595 = vadd.f32 %v1377, %v1536
      %v1596 = vadd.f32 %v1378, %v1549
      %v1597 = vadd.f32 %v1379, %v1562
      %v1598 = vadd.f32 %v1380, %v1575
      %v1599 = vadd.f32 %v1381, %v1588
      %v1600 = vld [vmem:[%s165] sm:$0xff]
      %v1601 = vld [vmem:[%s165 + $0x8] sm:$0xff]
      %v1602 = vld [vmem:[%s165 + $0x10] sm:$0xf]
      %s1603 = scalar_lea.vmem %s1, 28
      %v1604 = vld [vmem:[%s1603] sm:$0xf]
      %1606 = vst [vmem:[#allocation1] ss:$4 sm:$0xff] %v1600
      %s1608 = scalar_lea.vmem [#allocation1], 32
      %1609 = vst [vmem:[%s1608] ss:$4 sm:$0xff] %v1601
      %v1610 = vld.sshfl [vmem:[#allocation1] sm:$0xff pattern:$0x73625140]
      %v1612 = vld.sshfl [vmem:[#allocation1 + $0x8] sm:$0xff pattern:$0x73625140]
      %v1614 = vld.sshfl [vmem:[#allocation1 + $0x10] sm:$0xff pattern:$0x73625140]
      %v1616 = vld.sshfl [vmem:[#allocation1 + $0x18] sm:$0xff pattern:$0x73625140]
      %v1618 = vld.sshfl [vmem:[#allocation1 + $0x20] sm:$0xff pattern:$0x73625140]
      %v1620 = vld.sshfl [vmem:[#allocation1 + $0x28] sm:$0xff pattern:$0x73625140]
      %v1622 = vld.sshfl [vmem:[#allocation1 + $0x30] sm:$0xff pattern:$0x73625140]
      %v1624 = vld.sshfl [vmem:[#allocation1 + $0x38] sm:$0xff pattern:$0x73625140]
      %1627 = vst [vmem:[#allocation1] ss:$4 sm:$0xff] %v1602
      %v1628 = vld.sshfl [vmem:[#allocation1] sm:$0xff pattern:$0x73625140]
      %v1630 = vld.sshfl [vmem:[#allocation1 + $0x8] sm:$0xff pattern:$0x73625140]
      %1632 = vrot.lane.b32.xlu0 %v1610, 59
      %v1633 = vpop.permute.xlu0 %1632
      %1634 = vrot.lane.b32.xlu0 %v1612, 59
      %v1635 = vpop.permute.xlu0 %1634
      %1636 = vrot.lane.b32.xlu0 %v1614, 59
      %v1637 = vpop.permute.xlu0 %1636
      %1638 = vrot.lane.b32.xlu0 %v1616, 59
      %v1639 = vpop.permute.xlu0 %1638
      %1640 = vrot.lane.b32.xlu0 %v1618, 59
      %v1641 = vpop.permute.xlu0 %1640
      %1642 = vrot.lane.b32.xlu0 %v1620, 59
      %v1643 = vpop.permute.xlu0 %1642
      %1644 = vrot.lane.b32.xlu0 %v1622, 59
      %v1645 = vpop.permute.xlu0 %1644
      %1646 = vrot.lane.b32.xlu0 %v1624, 59
      %v1647 = vpop.permute.xlu0 %1646
      %1648 = vrot.lane.b32.xlu0 %v1628, 59
      %v1649 = vpop.permute.xlu0 %1648
      %1650 = vrot.lane.b32.xlu0 %v1630, 59
      %v1651 = vpop.permute.xlu0 %1650
      %vm1652 = vcmask 482304
      %v1653 = vsel %vm1652, %v1633, %v1635
      %v1654 = vsel %vm1652, %v1635, %v1637
      %v1655 = vsel %vm1652, %v1637, %v1639
      %v1656 = vsel %vm1652, %v1639, %v1641
      %v1657 = vsel %vm1652, %v1641, %v1643
      %v1658 = vsel %vm1652, %v1643, %v1645
      %v1659 = vsel %vm1652, %v1645, %v1647
      %v1660 = vsel %vm1652, %v1647, %v1649
      %v1661 = vsel %vm1652, %v1649, %v1651
      %v1663 = vsel %vm230, %v1604, 0
      %v1666 = vsel %vm234, %v1653, 0
      %v1669 = vsel %vm234, %v1654, 0
      %v1672 = vsel %vm234, %v1655, 0
      %v1675 = vsel %vm234, %v1656, 0
      %v1678 = vsel %vm234, %v1657, 0
      %v1681 = vsel %vm234, %v1658, 0
      %v1684 = vsel %vm234, %v1659, 0
      %v1687 = vsel %vm234, %v1660, 0
      %v1690 = vsel %vm234, %v1661, 0
      %1692 = vmatpush.bf16.msra.mxu0 0
      %1693 = vmatpush.bf16.msra.mxu0 0
      %1694 = vmatpush.bf16.msra.mxu0 0
      %1695 = vmatpush.bf16.msra.mxu0 0
      %1696 = vmatpush.bf16.msra.mxu0 0
      %1697 = vmatpush.bf16.msra.mxu0 0
      %1698 = vmatpush.bf16.msra.mxu0 0
      %1699 = vmatpush.bf16.msra.mxu0 %v1666
      %1700 = vmatmul.bf16.gmra.mxu0 %v1663
      %v1701 = vpop.f32.mrf.mxu0
      %v1702 = vadd.f32 0.0, %v1701
      %v1703 = vpop.f32.mrf.mxu0
      %1704 = vdwg.mxu0
      %1705 = vmatpush.bf16.msra.mxu0 0
      %1706 = vmatpush.bf16.msra.mxu0 0
      %1707 = vmatpush.bf16.msra.mxu0 0
      %1708 = vmatpush.bf16.msra.mxu0 0
      %1709 = vmatpush.bf16.msra.mxu0 0
      %1710 = vmatpush.bf16.msra.mxu0 0
      %1711 = vmatpush.bf16.msra.mxu0 0
      %1712 = vmatpush.bf16.msra.mxu0 %v1669
      %1713 = vmatmul.bf16.gmra.mxu0 %v1663
      %v1714 = vpop.f32.mrf.mxu0
      %v1715 = vadd.f32 0.0, %v1714
      %v1716 = vpop.f32.mrf.mxu0
      %1717 = vdwg.mxu0
      %1718 = vmatpush.bf16.msra.mxu0 0
      %1719 = vmatpush.bf16.msra.mxu0 0
      %1720 = vmatpush.bf16.msra.mxu0 0
      %1721 = vmatpush.bf16.msra.mxu0 0
      %1722 = vmatpush.bf16.msra.mxu0 0
      %1723 = vmatpush.bf16.msra.mxu0 0
      %1724 = vmatpush.bf16.msra.mxu0 0
      %1725 = vmatpush.bf16.msra.mxu0 %v1672
      %1726 = vmatmul.bf16.gmra.mxu0 %v1663
      %v1727 = vpop.f32.mrf.mxu0
      %v1728 = vadd.f32 0.0, %v1727
      %v1729 = vpop.f32.mrf.mxu0
      %1730 = vdwg.mxu0
      %1731 = vmatpush.bf16.msra.mxu0 0
      %1732 = vmatpush.bf16.msra.mxu0 0
      %1733 = vmatpush.bf16.msra.mxu0 0
      %1734 = vmatpush.bf16.msra.mxu0 0
      %1735 = vmatpush.bf16.msra.mxu0 0
      %1736 = vmatpush.bf16.msra.mxu0 0
      %1737 = vmatpush.bf16.msra.mxu0 0
      %1738 = vmatpush.bf16.msra.mxu0 %v1675
      %1739 = vmatmul.bf16.gmra.mxu0 %v1663
      %v1740 = vpop.f32.mrf.mxu0
      %v1741 = vadd.f32 0.0, %v1740
      %v1742 = vpop.f32.mrf.mxu0
      %1743 = vdwg.mxu0
      %1744 = vmatpush.bf16.msra.mxu0 0
      %1745 = vmatpush.bf16.msra.mxu0 0
      %1746 = vmatpush.bf16.msra.mxu0 0
      %1747 = vmatpush.bf16.msra.mxu0 0
      %1748 = vmatpush.bf16.msra.mxu0 0
      %1749 = vmatpush.bf16.msra.mxu0 0
      %1750 = vmatpush.bf16.msra.mxu0 0
      %1751 = vmatpush.bf16.msra.mxu0 %v1678
      %1752 = vmatmul.bf16.gmra.mxu0 %v1663
      %v1753 = vpop.f32.mrf.mxu0
      %v1754 = vadd.f32 0.0, %v1753
      %v1755 = vpop.f32.mrf.mxu0
      %1756 = vdwg.mxu0
      %1757 = vmatpush.bf16.msra.mxu0 0
      %1758 = vmatpush.bf16.msra.mxu0 0
      %1759 = vmatpush.bf16.msra.mxu0 0
      %1760 = vmatpush.bf16.msra.mxu0 0
      %1761 = vmatpush.bf16.msra.mxu0 0
      %1762 = vmatpush.bf16.msra.mxu0 0
      %1763 = vmatpush.bf16.msra.mxu0 0
      %1764 = vmatpush.bf16.msra.mxu0 %v1681
      %1765 = vmatmul.bf16.gmra.mxu0 %v1663
      %v1766 = vpop.f32.mrf.mxu0
      %v1767 = vadd.f32 0.0, %v1766
      %v1768 = vpop.f32.mrf.mxu0
      %1769 = vdwg.mxu0
      %1770 = vmatpush.bf16.msra.mxu0 0
      %1771 = vmatpush.bf16.msra.mxu0 0
      %1772 = vmatpush.bf16.msra.mxu0 0
      %1773 = vmatpush.bf16.msra.mxu0 0
      %1774 = vmatpush.bf16.msra.mxu0 0
      %1775 = vmatpush.bf16.msra.mxu0 0
      %1776 = vmatpush.bf16.msra.mxu0 0
      %1777 = vmatpush.bf16.msra.mxu0 %v1684
      %1778 = vmatmul.bf16.gmra.mxu0 %v1663
      %v1779 = vpop.f32.mrf.mxu0
      %v1780 = vadd.f32 0.0, %v1779
      %v1781 = vpop.f32.mrf.mxu0
      %1782 = vdwg.mxu0
      %1783 = vmatpush.bf16.msra.mxu0 0
      %1784 = vmatpush.bf16.msra.mxu0 0
      %1785 = vmatpush.bf16.msra.mxu0 0
      %1786 = vmatpush.bf16.msra.mxu0 0
      %1787 = vmatpush.bf16.msra.mxu0 0
      %1788 = vmatpush.bf16.msra.mxu0 0
      %1789 = vmatpush.bf16.msra.mxu0 0
      %1790 = vmatpush.bf16.msra.mxu0 %v1687
      %1791 = vmatmul.bf16.gmra.mxu0 %v1663
      %v1792 = vpop.f32.mrf.mxu0
      %v1793 = vadd.f32 0.0, %v1792
      %v1794 = vpop.f32.mrf.mxu0
      %1795 = vdwg.mxu0
      %1796 = vmatpush.bf16.msra.mxu0 0
      %1797 = vmatpush.bf16.msra.mxu0 0
      %1798 = vmatpush.bf16.msra.mxu0 0
      %1799 = vmatpush.bf16.msra.mxu0 0
      %1800 = vmatpush.bf16.msra.mxu0 0
      %1801 = vmatpush.bf16.msra.mxu0 0
      %1802 = vmatpush.bf16.msra.mxu0 0
      %1803 = vmatpush.bf16.msra.mxu0 %v1690
      %1804 = vmatmul.bf16.gmra.mxu0 %v1663
      %v1805 = vpop.f32.mrf.mxu0
      %v1806 = vadd.f32 0.0, %v1805
      %v1807 = vpop.f32.mrf.mxu0
      %1808 = vdwg.mxu0
      %v1809 = vadd.f32 %v1591, %v1702
      %v1810 = vadd.f32 %v1592, %v1715
      %v1811 = vadd.f32 %v1593, %v1728
      %v1812 = vadd.f32 %v1594, %v1741
      %v1813 = vadd.f32 %v1595, %v1754
      %v1814 = vadd.f32 %v1596, %v1767
      %v1815 = vadd.f32 %v1597, %v1780
      %v1816 = vadd.f32 %v1598, %v1793
      %v1817 = vadd.f32 %v1599, %v1806
      %v1818 = vld [vmem:[%s165] sm:$0xff]
      %v1819 = vld [vmem:[%s165 + $0x8] sm:$0xff]
      %v1820 = vld [vmem:[%s165 + $0x10] sm:$0xf]
      %s1821 = scalar_lea.vmem %s1, 32
      %v1822 = vld [vmem:[%s1821] sm:$0xf]
      %1824 = vst [vmem:[#allocation1] ss:$4 sm:$0xff] %v1818
      %s1826 = scalar_lea.vmem [#allocation1], 32
      %1827 = vst [vmem:[%s1826] ss:$4 sm:$0xff] %v1819
      %v1828 = vld.sshfl [vmem:[#allocation1] sm:$0xff pattern:$0x73625140]
      %v1830 = vld.sshfl [vmem:[#allocation1 + $0x8] sm:$0xff pattern:$0x73625140]
      %v1832 = vld.sshfl [vmem:[#allocation1 + $0x10] sm:$0xff pattern:$0x73625140]
      %v1834 = vld.sshfl [vmem:[#allocation1 + $0x18] sm:$0xff pattern:$0x73625140]
      %v1836 = vld.sshfl [vmem:[#allocation1 + $0x20] sm:$0xff pattern:$0x73625140]
      %v1838 = vld.sshfl [vmem:[#allocation1 + $0x28] sm:$0xff pattern:$0x73625140]
      %v1840 = vld.sshfl [vmem:[#allocation1 + $0x30] sm:$0xff pattern:$0x73625140]
      %v1842 = vld.sshfl [vmem:[#allocation1 + $0x38] sm:$0xff pattern:$0x73625140]
      %1845 = vst [vmem:[#allocation1] ss:$4 sm:$0xff] %v1820
      %v1846 = vld.sshfl [vmem:[#allocation1] sm:$0xff pattern:$0x73625140]
      %v1848 = vld.sshfl [vmem:[#allocation1 + $0x8] sm:$0xff pattern:$0x73625140]
      %1850 = vrot.lane.b32.xlu0 %v1828, 58
      %v1851 = vpop.permute.xlu0 %1850
      %1852 = vrot.lane.b32.xlu0 %v1830, 58
      %v1853 = vpop.permute.xlu0 %1852
      %1854 = vrot.lane.b32.xlu0 %v1832, 58
      %v1855 = vpop.permute.xlu0 %1854
      %1856 = vrot.lane.b32.xlu0 %v1834, 58
      %v1857 = vpop.permute.xlu0 %1856
      %1858 = vrot.lane.b32.xlu0 %v1836, 58
      %v1859 = vpop.permute.xlu0 %1858
      %1860 = vrot.lane.b32.xlu0 %v1838, 58
      %v1861 = vpop.permute.xlu0 %1860
      %1862 = vrot.lane.b32.xlu0 %v1840, 58
      %v1863 = vpop.permute.xlu0 %1862
      %1864 = vrot.lane.b32.xlu0 %v1842, 58
      %v1865 = vpop.permute.xlu0 %1864
      %1866 = vrot.lane.b32.xlu0 %v1846, 58
      %v1867 = vpop.permute.xlu0 %1866
      %1868 = vrot.lane.b32.xlu0 %v1848, 58
      %v1869 = vpop.permute.xlu0 %1868
      %vm1870 = vcmask 474112
      %v1871 = vsel %vm1870, %v1851, %v1853
      %v1872 = vsel %vm1870, %v1853, %v1855
      %v1873 = vsel %vm1870, %v1855, %v1857
      %v1874 = vsel %vm1870, %v1857, %v1859
      %v1875 = vsel %vm1870, %v1859, %v1861
      %v1876 = vsel %vm1870, %v1861, %v1863
      %v1877 = vsel %vm1870, %v1863, %v1865
      %v1878 = vsel %vm1870, %v1865, %v1867
      %v1879 = vsel %vm1870, %v1867, %v1869
      %v1881 = vsel %vm230, %v1822, 0
      %v1884 = vsel %vm234, %v1871, 0
      %v1887 = vsel %vm234, %v1872, 0
      %v1890 = vsel %vm234, %v1873, 0
      %v1893 = vsel %vm234, %v1874, 0
      %v1896 = vsel %vm234, %v1875, 0
      %v1899 = vsel %vm234, %v1876, 0
      %v1902 = vsel %vm234, %v1877, 0
      %v1905 = vsel %vm234, %v1878, 0
      %v1908 = vsel %vm234, %v1879, 0
      %1910 = vmatpush.bf16.msra.mxu0 0
      %1911 = vmatpush.bf16.msra.mxu0 0
      %1912 = vmatpush.bf16.msra.mxu0 0
      %1913 = vmatpush.bf16.msra.mxu0 0
      %1914 = vmatpush.bf16.msra.mxu0 0
      %1915 = vmatpush.bf16.msra.mxu0 0
      %1916 = vmatpush.bf16.msra.mxu0 0
      %1917 = vmatpush.bf16.msra.mxu0 %v1884
      %1918 = vmatmul.bf16.gmra.mxu0 %v1881
      %v1919 = vpop.f32.mrf.mxu0
      %v1920 = vadd.f32 0.0, %v1919
      %v1921 = vpop.f32.mrf.mxu0
      %1922 = vdwg.mxu0
      %1923 = vmatpush.bf16.msra.mxu0 0
      %1924 = vmatpush.bf16.msra.mxu0 0
      %1925 = vmatpush.bf16.msra.mxu0 0
      %1926 = vmatpush.bf16.msra.mxu0 0
      %1927 = vmatpush.bf16.msra.mxu0 0
      %1928 = vmatpush.bf16.msra.mxu0 0
      %1929 = vmatpush.bf16.msra.mxu0 0
      %1930 = vmatpush.bf16.msra.mxu0 %v1887
      %1931 = vmatmul.bf16.gmra.mxu0 %v1881
      %v1932 = vpop.f32.mrf.mxu0
      %v1933 = vadd.f32 0.0, %v1932
      %v1934 = vpop.f32.mrf.mxu0
      %1935 = vdwg.mxu0
      %1936 = vmatpush.bf16.msra.mxu0 0
      %1937 = vmatpush.bf16.msra.mxu0 0
      %1938 = vmatpush.bf16.msra.mxu0 0
      %1939 = vmatpush.bf16.msra.mxu0 0
      %1940 = vmatpush.bf16.msra.mxu0 0
      %1941 = vmatpush.bf16.msra.mxu0 0
      %1942 = vmatpush.bf16.msra.mxu0 0
      %1943 = vmatpush.bf16.msra.mxu0 %v1890
      %1944 = vmatmul.bf16.gmra.mxu0 %v1881
      %v1945 = vpop.f32.mrf.mxu0
      %v1946 = vadd.f32 0.0, %v1945
      %v1947 = vpop.f32.mrf.mxu0
      %1948 = vdwg.mxu0
      %1949 = vmatpush.bf16.msra.mxu0 0
      %1950 = vmatpush.bf16.msra.mxu0 0
      %1951 = vmatpush.bf16.msra.mxu0 0
      %1952 = vmatpush.bf16.msra.mxu0 0
      %1953 = vmatpush.bf16.msra.mxu0 0
      %1954 = vmatpush.bf16.msra.mxu0 0
      %1955 = vmatpush.bf16.msra.mxu0 0
      %1956 = vmatpush.bf16.msra.mxu0 %v1893
      %1957 = vmatmul.bf16.gmra.mxu0 %v1881
      %v1958 = vpop.f32.mrf.mxu0
      %v1959 = vadd.f32 0.0, %v1958
      %v1960 = vpop.f32.mrf.mxu0
      %1961 = vdwg.mxu0
      %1962 = vmatpush.bf16.msra.mxu0 0
      %1963 = vmatpush.bf16.msra.mxu0 0
      %1964 = vmatpush.bf16.msra.mxu0 0
      %1965 = vmatpush.bf16.msra.mxu0 0
      %1966 = vmatpush.bf16.msra.mxu0 0
      %1967 = vmatpush.bf16.msra.mxu0 0
      %1968 = vmatpush.bf16.msra.mxu0 0
      %1969 = vmatpush.bf16.msra.mxu0 %v1896
      %1970 = vmatmul.bf16.gmra.mxu0 %v1881
      %v1971 = vpop.f32.mrf.mxu0
      %v1972 = vadd.f32 0.0, %v1971
      %v1973 = vpop.f32.mrf.mxu0
      %1974 = vdwg.mxu0
      %1975 = vmatpush.bf16.msra.mxu0 0
      %1976 = vmatpush.bf16.msra.mxu0 0
      %1977 = vmatpush.bf16.msra.mxu0 0
      %1978 = vmatpush.bf16.msra.mxu0 0
      %1979 = vmatpush.bf16.msra.mxu0 0
      %1980 = vmatpush.bf16.msra.mxu0 0
      %1981 = vmatpush.bf16.msra.mxu0 0
      %1982 = vmatpush.bf16.msra.mxu0 %v1899
      %1983 = vmatmul.bf16.gmra.mxu0 %v1881
      %v1984 = vpop.f32.mrf.mxu0
      %v1985 = vadd.f32 0.0, %v1984
      %v1986 = vpop.f32.mrf.mxu0
      %1987 = vdwg.mxu0
      %1988 = vmatpush.bf16.msra.mxu0 0
      %1989 = vmatpush.bf16.msra.mxu0 0
      %1990 = vmatpush.bf16.msra.mxu0 0
      %1991 = vmatpush.bf16.msra.mxu0 0
      %1992 = vmatpush.bf16.msra.mxu0 0
      %1993 = vmatpush.bf16.msra.mxu0 0
      %1994 = vmatpush.bf16.msra.mxu0 0
      %1995 = vmatpush.bf16.msra.mxu0 %v1902
      %1996 = vmatmul.bf16.gmra.mxu0 %v1881
      %v1997 = vpop.f32.mrf.mxu0
      %v1998 = vadd.f32 0.0, %v1997
      %v1999 = vpop.f32.mrf.mxu0
      %2000 = vdwg.mxu0
      %2001 = vmatpush.bf16.msra.mxu0 0
      %2002 = vmatpush.bf16.msra.mxu0 0
      %2003 = vmatpush.bf16.msra.mxu0 0
      %2004 = vmatpush.bf16.msra.mxu0 0
      %2005 = vmatpush.bf16.msra.mxu0 0
      %2006 = vmatpush.bf16.msra.mxu0 0
      %2007 = vmatpush.bf16.msra.mxu0 0
      %2008 = vmatpush.bf16.msra.mxu0 %v1905
      %2009 = vmatmul.bf16.gmra.mxu0 %v1881
      %v2010 = vpop.f32.mrf.mxu0
      %v2011 = vadd.f32 0.0, %v2010
      %v2012 = vpop.f32.mrf.mxu0
      %2013 = vdwg.mxu0
      %2014 = vmatpush.bf16.msra.mxu0 0
      %2015 = vmatpush.bf16.msra.mxu0 0
      %2016 = vmatpush.bf16.msra.mxu0 0
      %2017 = vmatpush.bf16.msra.mxu0 0
      %2018 = vmatpush.bf16.msra.mxu0 0
      %2019 = vmatpush.bf16.msra.mxu0 0
      %2020 = vmatpush.bf16.msra.mxu0 0
      %2021 = vmatpush.bf16.msra.mxu0 %v1908
      %2022 = vmatmul.bf16.gmra.mxu0 %v1881
      %v2023 = vpop.f32.mrf.mxu0
      %v2024 = vadd.f32 0.0, %v2023
      %v2025 = vpop.f32.mrf.mxu0
      %2026 = vdwg.mxu0
      %v2027 = vadd.f32 %v1809, %v1920
      %v2028 = vadd.f32 %v1810, %v1933
      %v2029 = vadd.f32 %v1811, %v1946
      %v2030 = vadd.f32 %v1812, %v1959
      %v2031 = vadd.f32 %v1813, %v1972
      %v2032 = vadd.f32 %v1814, %v1985
      %v2033 = vadd.f32 %v1815, %v1998
      %v2034 = vadd.f32 %v1816, %v2011
      %v2035 = vadd.f32 %v1817, %v2024
      %v2036 = vld [vmem:[%s2] sm:$0xff]
      %2038 = vset.pattern.permute.xlu0 0
      %2039 = vperm.xlu0 %2038, %v2036
      %v2040 = vpop.permute.xlu0 %2039
      %v2042 = vadd.f32 %v2027, %v2040
      %v2043 = vadd.f32 %v2028, %v2040
      %v2044 = vadd.f32 %v2029, %v2040
      %v2045 = vadd.f32 %v2030, %v2040
      %v2046 = vadd.f32 %v2031, %v2040
      %v2047 = vadd.f32 %v2032, %v2040
      %v2048 = vadd.f32 %v2033, %v2040
      %v2049 = vadd.f32 %v2034, %v2040
      %v2050 = vadd.f32 %v2035, %v2040
      %2051 = vst [vmem:[%s170] sm:$0xff] %v2042
      %2052 = vst [vmem:[%s170 + $0x8] sm:$0xff] %v2043
      %2053 = vst [vmem:[%s170 + $0x10] sm:$0xff] %v2044
      %2054 = vst [vmem:[%s170 + $0x18] sm:$0xff] %v2045
      %2055 = vst [vmem:[%s170 + $0x20] sm:$0xff] %v2046
      %2056 = vst [vmem:[%s170 + $0x28] sm:$0xff] %v2047
      %2057 = vst [vmem:[%s170 + $0x30] sm:$0xff] %v2048
      %2058 = vst [vmem:[%s170 + $0x38] sm:$0xff] %v2049
      %vm2059 = vcmask 523264
      %2060 = vst.msk [vmem:[%s170 + $0x40] sm:$0xff] %vm2059, %v2050
      %p2061 = scmp.lt.s32.totalorder %s14, 1
      %s2062 = scalar_select %p2061, %s14, 1
      %s2063 = smul.addr %s2062, 9
      %s2064 = smul.addr %s2063, 8
      %s2065 = scalar_lea.vmem %s3, %s2064
      // Predicated region
      $region33: #{upconv2d.1} parent=31 // pred_check
        %p2066 = pneg %p100
      $region34: #{upconv2d.1} parent=31 // pred_check_branch
        %2068 = sbr.rel (%p2066) target = $region36
      $region35: #{upconv2d.1} parent=31 // pred_region
        _
      $region36: #{upconv2d.1} parent=31 // pred_fallthru
        _
    $region32: #{upconv2d.1} parent=5 // pred_fallthru
      _
    %p2069 = scmp.le.s32.totalorder 2, %s9
    // Predicated region
    $region37: #{upconv2d.1} parent=5 // pred_check
      %p2070 = pneg %p2069
    $region38: #{upconv2d.1} parent=5 // pred_check_branch
      %2072 = sbr.rel (%p2070) target = $region40
    $region39: #{upconv2d.1} parent=5 // pred_region
      %s2073 = ssub.s32 %s9, 2
      // Predicated region
      $region41: #{upconv2d.1} parent=39 // pred_check
        %p2074 = pneg %p106
      $region42: #{upconv2d.1} parent=39 // pred_check_branch
        %2076 = sbr.rel (%p2074) target = $region44
      $region43: #{upconv2d.1} parent=39 // pred_region
        %p2077 = scmp.lt.s32.totalorder %s15, 1
        %s2078 = scalar_select %p2077, %s15, 1
        %s2079 = smul.addr %s2078, 9
        %s2080 = smul.addr %s2079, 8
        %s2081 = scalar_lea.vmem %s3, %s2080
      $region44: #{upconv2d.1} parent=39 // pred_fallthru
        _
    $region40: #{upconv2d.1} parent=5 // pred_fallthru
      _
  $region6: #{upconv2d.1} parent=0 // loop_footer
    %s13 = sadd.s32 1, %s9
  $region7: #{upconv2d.1} parent=0 // loop_footer_branch
    %8 = sbr.rel target = $region3
  $region8: #{upconv2d.1} parent=0 // loop_exit
    _

</llo_original>
